<compile_context>
chip_gen: v5e
topology: v5e:2x2
jax: 0.10.0
libtpu: 0.0.40
codegen_flags: <defaults>
</compile_context>

<pallas_src>
import jax
import jax.numpy as jnp
from jax.experimental import pallas as pl
from jax.experimental.pallas import tpu as pltpu


def _round_up(x, m):
    return (x + m - 1) // m * m


def _make_unfold_kernel(n_locs, fold_size, fold_stride, W):
    """One grid step = all n_locs**2 crops for one (batch, channel-tile).

    x_ref: (c_block, H*W)      -- lane-dense flattened image tile
    o_ref: (L, c_block, f*f)   -- lane-packed patch rows
    """
    f = fold_size

    def kernel(x_ref, o_ref):
        # Fully static unroll: every offset is a Python int, so each copy is a
        # static (c_block, f) slab move with no scalar/address computation.
        # TODO(synk): for very large n_locs*f, wrap the (ih, kh) loops in
        # lax.fori_loop(..., unroll=True) with pl.multiple_of hints to bound
        # instruction-stream size; static unroll is fine at these sizes.
        for ih in range(n_locs):
            for iw in range(n_locs):
                l = ih * n_locs + iw
                base = (ih * fold_stride) * W + iw * fold_stride
                for kh in range(f):
                    o_ref[l, :, pl.ds(kh * f, f)] = x_ref[:, pl.ds(base + kh * W, f)]

    return kernel


def _step_vmem_bytes(c_block, HW, L, fold_size, itemsize):
    """Approx. double-buffered VMEM residency of one grid step."""
    f2 = fold_size * fold_size
    in_blk = _round_up(c_block, 8) * _round_up(HW, 128) * itemsize
    out_blk = L * _round_up(c_block, 8) * _round_up(f2, 128) * itemsize
    return 2 * (in_blk + out_blk)


def _valid_c_blocks(C):
    # Second-to-last block dim must be a multiple of 8 or equal the full dim.
    return [C] + [cb for cb in range(C - 1, 0, -1) if C % cb == 0 and cb % 8 == 0]


def _pick_c_block(N, C, HW, L, fold_size, itemsize, vmem_budget_bytes):
    """Largest valid channel tile whose residency fits the budget."""
    cands = _valid_c_blocks(C)
    c_block = cands[-1]
    for cb in cands:
        if _step_vmem_bytes(cb, HW, L, fold_size, itemsize) <= vmem_budget_bytes:
            c_block = cb
            break
    # v7x has two TensorCores: when N is tiny, prefer a finer (still valid)
    # channel tile so dimension_semantics=("parallel","parallel") can spread
    # work across both cores.
    while N * (C // c_block) < 4:
        finer = [cb for cb in cands if cb < c_block]
        if not finer:
            break
        c_block = finer[0]
    return c_block


def unfold_pallas(x, img_size, fold_size, stride=None, final_size=None,
                  c_block=None, vmem_budget_bytes=48 * 1024 * 1024):
    """Pallas equivalent of cortex_DIM Unfold.forward.

    Args:
        x: (N, C, H, W) input.
        img_size, fold_size, stride, final_size: as in the torch module.
        c_block: optional channel tile (must equal C, or divide C and be a
            multiple of 8). Default: auto-sized against `vmem_budget_bytes`
            (48 MiB default is safe for v7x's 64 MiB physical VMEM; v5e/v6e
            can run the full-channel block).
    """
    # Explicit `is None` checks (stride=0 / final_size=0 must not silently
    # fall back like the original `or` expressions would).
    fold_stride = fold_size // 2 if stride is None else stride
    n_locs = (2 * int(img_size / fold_size) - 1) if final_size is None else final_size

    N, C, H, W = x.shape
    L = n_locs * n_locs
    f = fold_size
    f2 = f * f

    # Trace-time bounds guard: OOB reads on a VMEM ref are unchecked on TPU and
    # would silently return adjacent/stale data.
    span = (n_locs - 1) * fold_stride + fold_size
    if n_locs <= 0:
        raise ValueError(f"n_locs must be positive, got {n_locs}")
    if span > H or span > W:
        raise ValueError(
            f"Unfold crops exceed input extent: need {span}, have H={H}, W={W} "
            f"(fold_size={fold_size}, stride={fold_stride}, n_locs={n_locs})"
        )

    itemsize = jnp.dtype(x.dtype).itemsize
    if c_block is None:
        c_block = _pick_c_block(N, C, H * W, L, f, itemsize, vmem_budget_bytes)
    elif c_block != C and (C % c_block != 0 or c_block % 8 != 0):
        raise ValueError(
            f"c_block={c_block} must equal C={C}, or divide C and be a multiple of 8"
        )
    n_cb = C // c_block

    step_bytes = _step_vmem_bytes(c_block, H * W, L, f, itemsize)
    # Explicit scoped-VMEM limit (v5e default is only 16 MiB); cap at v7x's
    # 64 MiB physical so the same config runs everywhere.
    vmem_limit = int(min(max(2 * step_bytes, 32 * 1024 * 1024), 64 * 1024 * 1024))

    # Lane-dense input view: merging (H, W) is a free trailing-dim reshape and
    # turns the per-step image DMA into one contiguous run (no lane padding
    # for W < 128).
    x_flat = x.reshape(N, C, H * W)

    kernel = _make_unfold_kernel(n_locs, f, fold_stride, W)

    # Intermediate layout (N, L, C, f*f).  When c_block == C the per-step
    # write-back region is one fully contiguous HBM slab of L*C*f*f elements;
    # when c_block < C it is L strided runs of c_block*f*f elements (>= 2 KiB
    # each for c_block >= 8, f >= 8), which is why the largest fitting tile is
    # preferred.
    out4 = pl.pallas_call(
        kernel,
        out_shape=jax.ShapeDtypeStruct((N, L, C, f2), x.dtype),
        grid=(N, n_cb),
        in_specs=[
            # NOTE: if VMEM is ever the limiter, pipeline_mode=pl.Buffered(1)
            # on this spec reclaims one input buffer at near-zero overlap cost
            # (the in-kernel "compute" is a trivial VMEM copy).
            pl.BlockSpec((None, c_block, H * W), lambda n, cb: (n, cb, 0)),
        ],
        out_specs=pl.BlockSpec(
            (None, L, c_block, f2), lambda n, cb: (n, 0, cb, 0)
        ),
        compiler_params=pltpu.CompilerParams(
            # All grid points are independent -> both axes parallel (lets the
            # two v7x TensorCores share work; neutral on single-TC v5e/v6e).
            dimension_semantics=("parallel", "parallel"),
            vmem_limit_bytes=vmem_limit,
        ),
        cost_estimate=pl.CostEstimate(
            flops=0,
            transcendentals=0,
            bytes_accessed=(N * C * H * W + N * L * C * f2) * itemsize,
        ),
    )(x_flat)

    # (N, L, C, f*f) -> (N*L, C, f, f): merges leading dims / splits the
    # trailing dim only, so this is a free view.
    # NOTE: for bf16/int8 inputs the f*f=64 minor dim is still below one
    # packed vreg row; legal (full-dim block) but with extra padding waste.
    return out4.reshape(N * L, C, f, f)


def unfold_reference(x, img_size, fold_size, stride=None, final_size=None):
    """Pure-JAX reference mirroring torch.nn.Unfold + reshape/permute."""
    fold_stride = fold_size // 2 if stride is None else stride
    n_locs = (2 * int(img_size / fold_size) - 1) if final_size is None else final_size
    N, C, H, W = x.shape
    patches = []
    for n in range(N):
        for ih in range(n_locs):
            for iw in range(n_locs):
                patches.append(
                    x[n, :, ih * fold_stride:ih * fold_stride + fold_size,
                          iw * fold_stride:iw * fold_stride + fold_size]
                )
    return jnp.stack(patches, axis=0)


if __name__ == "__main__":
    # Small shapes consistent with the module: 16x16 images, 8x8 crops, stride 4.
    N, C, img_size, fold_size = 2, 4, 16, 8

    key = jax.random.PRNGKey(0)
    x = jax.random.normal(key, (N, C, img_size, img_size), dtype=jnp.float32)

    out = unfold_pallas(x, img_size=img_size, fold_size=fold_size)
    out = jax.block_until_ready(out)

    ref = unfold_reference(x, img_size=img_size, fold_size=fold_size)
    assert out.shape == ref.shape, (out.shape, ref.shape)
    assert jnp.array_equal(out, ref), "Pallas unfold mismatch vs reference"

    print("KERNEL_OK")
</pallas_src>

<mosaic_0001>
module attributes {stable_mosaic.version = 11 : i64} {
  func.func @kernel(%arg0: i32, %arg1: i32, %arg2: memref<1x4x256xf32, #tpu.memory_space<vmem>>, %arg3: memref<1x9x4x64xf32, #tpu.memory_space<vmem>>) attributes {dimension_semantics = [#tpu.dimension_semantics<parallel>, #tpu.dimension_semantics<parallel>], iteration_bounds = array<i64: 2, 1>, scalar_prefetch = 0 : i64, scratch_operands = 0 : i64, tpu.core_type = #tpu.core_type<tc>, window_params = [{transform_indices = @transform_0, window_bounds = array<i64: 1, 4, 256>}, {transform_indices = @transform_1, window_bounds = array<i64: 1, 9, 4, 64>}]} {
    %c0 = arith.constant 0 : index
    %c0_0 = arith.constant 0 : index
    %c0_1 = arith.constant 0 : index
    %0 = vector.load %arg2[%c0, %c0_0, %c0_1] : memref<1x4x256xf32, #tpu.memory_space<vmem>>, vector<1x4x8xf32>
    %1 = vector.shape_cast %0 : vector<1x4x8xf32> to vector<4x8xf32>
    %c0_2 = arith.constant 0 : index
    %c0_3 = arith.constant 0 : index
    %c0_4 = arith.constant 0 : index
    %c0_5 = arith.constant 0 : index
    %2 = vector.load %arg3[%c0_2, %c0_3, %c0_4, %c0_5] : memref<1x9x4x64xf32, #tpu.memory_space<vmem>>, vector<1x1x4x8xf32>
    %3 = vector.shape_cast %2 : vector<1x1x4x8xf32> to vector<4x8xf32>
    %4 = vector.shape_cast %1 : vector<4x8xf32> to vector<1x1x4x8xf32>
    tpu.vector_store %arg3[%c0_2, %c0_3, %c0_4, %c0_5], %4 {strides = array<i32>} : memref<1x9x4x64xf32, #tpu.memory_space<vmem>>, vector<1x1x4x8xf32>,
    %c0_6 = arith.constant 0 : index
    %c0_7 = arith.constant 0 : index
    %c16 = arith.constant 16 : index
    %5 = vector.load %arg2[%c0_6, %c0_7, %c16] : memref<1x4x256xf32, #tpu.memory_space<vmem>>, vector<1x4x8xf32>
    %6 = vector.shape_cast %5 : vector<1x4x8xf32> to vector<4x8xf32>
    %c0_8 = arith.constant 0 : index
    %c0_9 = arith.constant 0 : index
    %c0_10 = arith.constant 0 : index
    %c8 = arith.constant 8 : index
    %7 = vector.load %arg3[%c0_8, %c0_9, %c0_10, %c8] : memref<1x9x4x64xf32, #tpu.memory_space<vmem>>, vector<1x1x4x8xf32>
    %8 = vector.shape_cast %7 : vector<1x1x4x8xf32> to vector<4x8xf32>
    %9 = vector.shape_cast %6 : vector<4x8xf32> to vector<1x1x4x8xf32>
    tpu.vector_store %arg3[%c0_8, %c0_9, %c0_10, %c8], %9 {strides = array<i32>} : memref<1x9x4x64xf32, #tpu.memory_space<vmem>>, vector<1x1x4x8xf32>,
    %c0_11 = arith.constant 0 : index
    %c0_12 = arith.constant 0 : index
    %c32 = arith.constant 32 : index
    %10 = vector.load %arg2[%c0_11, %c0_12, %c32] : memref<1x4x256xf32, #tpu.memory_space<vmem>>, vector<1x4x8xf32>
    %11 = vector.shape_cast %10 : vector<1x4x8xf32> to vector<4x8xf32>
    %c0_13 = arith.constant 0 : index
    %c0_14 = arith.constant 0 : index
    %c0_15 = arith.constant 0 : index
    %c16_16 = arith.constant 16 : index
    %12 = vector.load %arg3[%c0_13, %c0_14, %c0_15, %c16_16] : memref<1x9x4x64xf32, #tpu.memory_space<vmem>>, vector<1x1x4x8xf32>
    %13 = vector.shape_cast %12 : vector<1x1x4x8xf32> to vector<4x8xf32>
    %14 = vector.shape_cast %11 : vector<4x8xf32> to vector<1x1x4x8xf32>
    tpu.vector_store %arg3[%c0_13, %c0_14, %c0_15, %c16_16], %14 {strides = array<i32>} : memref<1x9x4x64xf32, #tpu.memory_space<vmem>>, vector<1x1x4x8xf32>,
    %c0_17 = arith.constant 0 : index
    %c0_18 = arith.constant 0 : index
    %c48 = arith.constant 48 : index
    %15 = vector.load %arg2[%c0_17, %c0_18, %c48] : memref<1x4x256xf32, #tpu.memory_space<vmem>>, vector<1x4x8xf32>
    %16 = vector.shape_cast %15 : vector<1x4x8xf32> to vector<4x8xf32>
    %c0_19 = arith.constant 0 : index
    %c0_20 = arith.constant 0 : index
    %c0_21 = arith.constant 0 : index
    %c24 = arith.constant 24 : index
    %17 = vector.load %arg3[%c0_19, %c0_20, %c0_21, %c24] : memref<1x9x4x64xf32, #tpu.memory_space<vmem>>, vector<1x1x4x8xf32>
    %18 = vector.shape_cast %17 : vector<1x1x4x8xf32> to vector<4x8xf32>
    %19 = vector.shape_cast %16 : vector<4x8xf32> to vector<1x1x4x8xf32>
    tpu.vector_store %arg3[%c0_19, %c0_20, %c0_21, %c24], %19 {strides = array<i32>} : memref<1x9x4x64xf32, #tpu.memory_space<vmem>>, vector<1x1x4x8xf32>,
    %c0_22 = arith.constant 0 : index
    %c0_23 = arith.constant 0 : index
    %c64 = arith.constant 64 : index
    %20 = vector.load %arg2[%c0_22, %c0_23, %c64] : memref<1x4x256xf32, #tpu.memory_space<vmem>>, vector<1x4x8xf32>
    %21 = vector.shape_cast %20 : vector<1x4x8xf32> to vector<4x8xf32>
    %c0_24 = arith.constant 0 : index
    %c0_25 = arith.constant 0 : index
    %c0_26 = arith.constant 0 : index
    %c32_27 = arith.constant 32 : index
    %22 = vector.load %arg3[%c0_24, %c0_25, %c0_26, %c32_27] : memref<1x9x4x64xf32, #tpu.memory_space<vmem>>, vector<1x1x4x8xf32>
    %23 = vector.shape_cast %22 : vector<1x1x4x8xf32> to vector<4x8xf32>
    %24 = vector.shape_cast %21 : vector<4x8xf32> to vector<1x1x4x8xf32>
    tpu.vector_store %arg3[%c0_24, %c0_25, %c0_26, %c32_27], %24 {strides = array<i32>} : memref<1x9x4x64xf32, #tpu.memory_space<vmem>>, vector<1x1x4x8xf32>,
    %c0_28 = arith.constant 0 : index
    %c0_29 = arith.constant 0 : index
    %c80 = arith.constant 80 : index
    %25 = vector.load %arg2[%c0_28, %c0_29, %c80] : memref<1x4x256xf32, #tpu.memory_space<vmem>>, vector<1x4x8xf32>
    %26 = vector.shape_cast %25 : vector<1x4x8xf32> to vector<4x8xf32>
    %c0_30 = arith.constant 0 : index
    %c0_31 = arith.constant 0 : index
    %c0_32 = arith.constant 0 : index
    %c40 = arith.constant 40 : index
    %27 = vector.load %arg3[%c0_30, %c0_31, %c0_32, %c40] : memref<1x9x4x64xf32, #tpu.memory_space<vmem>>, vector<1x1x4x8xf32>
    %28 = vector.shape_cast %27 : vector<1x1x4x8xf32> to vector<4x8xf32>
    %29 = vector.shape_cast %26 : vector<4x8xf32> to vector<1x1x4x8xf32>
    tpu.vector_store %arg3[%c0_30, %c0_31, %c0_32, %c40], %29 {strides = array<i32>} : memref<1x9x4x64xf32, #tpu.memory_space<vmem>>, vector<1x1x4x8xf32>,
    %c0_33 = arith.constant 0 : index
    %c0_34 = arith.constant 0 : index
    %c96 = arith.constant 96 : index
    %30 = vector.load %arg2[%c0_33, %c0_34, %c96] : memref<1x4x256xf32, #tpu.memory_space<vmem>>, vector<1x4x8xf32>
    %31 = vector.shape_cast %30 : vector<1x4x8xf32> to vector<4x8xf32>
    %c0_35 = arith.constant 0 : index
    %c0_36 = arith.constant 0 : index
    %c0_37 = arith.constant 0 : index
    %c48_38 = arith.constant 48 : index
    %32 = vector.load %arg3[%c0_35, %c0_36, %c0_37, %c48_38] : memref<1x9x4x64xf32, #tpu.memory_space<vmem>>, vector<1x1x4x8xf32>
    %33 = vector.shape_cast %32 : vector<1x1x4x8xf32> to vector<4x8xf32>
    %34 = vector.shape_cast %31 : vector<4x8xf32> to vector<1x1x4x8xf32>
    tpu.vector_store %arg3[%c0_35, %c0_36, %c0_37, %c48_38], %34 {strides = array<i32>} : memref<1x9x4x64xf32, #tpu.memory_space<vmem>>, vector<1x1x4x8xf32>,
    %c0_39 = arith.constant 0 : index
    %c0_40 = arith.constant 0 : index
    %c112 = arith.constant 112 : index
    %35 = vector.load %arg2[%c0_39, %c0_40, %c112] : memref<1x4x256xf32, #tpu.memory_space<vmem>>, vector<1x4x8xf32>
    %36 = vector.shape_cast %35 : vector<1x4x8xf32> to vector<4x8xf32>
    %c0_41 = arith.constant 0 : index
    %c0_42 = arith.constant 0 : index
    %c0_43 = arith.constant 0 : index
    %c56 = arith.constant 56 : index
    %37 = vector.load %arg3[%c0_41, %c0_42, %c0_43, %c56] : memref<1x9x4x64xf32, #tpu.memory_space<vmem>>, vector<1x1x4x8xf32>
    %38 = vector.shape_cast %37 : vector<1x1x4x8xf32> to vector<4x8xf32>
    %39 = vector.shape_cast %36 : vector<4x8xf32> to vector<1x1x4x8xf32>
    tpu.vector_store %arg3[%c0_41, %c0_42, %c0_43, %c56], %39 {strides = array<i32>} : memref<1x9x4x64xf32, #tpu.memory_space<vmem>>, vector<1x1x4x8xf32>,
    %c0_44 = arith.constant 0 : index
    %c0_45 = arith.constant 0 : index
    %c4 = arith.constant 4 : index
    %40 = vector.load %arg2[%c0_44, %c0_45, %c4] : memref<1x4x256xf32, #tpu.memory_space<vmem>>, vector<1x4x8xf32>
    %41 = vector.shape_cast %40 : vector<1x4x8xf32> to vector<4x8xf32>
    %c0_46 = arith.constant 0 : index
    %c1 = arith.constant 1 : index
    %c0_47 = arith.constant 0 : index
    %c0_48 = arith.constant 0 : index
    %42 = vector.load %arg3[%c0_46, %c1, %c0_47, %c0_48] : memref<1x9x4x64xf32, #tpu.memory_space<vmem>>, vector<1x1x4x8xf32>
    %43 = vector.shape_cast %42 : vector<1x1x4x8xf32> to vector<4x8xf32>
    %44 = vector.shape_cast %41 : vector<4x8xf32> to vector<1x1x4x8xf32>
    tpu.vector_store %arg3[%c0_46, %c1, %c0_47, %c0_48], %44 {strides = array<i32>} : memref<1x9x4x64xf32, #tpu.memory_space<vmem>>, vector<1x1x4x8xf32>,
    %c0_49 = arith.constant 0 : index
    %c0_50 = arith.constant 0 : index
    %c20 = arith.constant 20 : index
    %45 = vector.load %arg2[%c0_49, %c0_50, %c20] : memref<1x4x256xf32, #tpu.memory_space<vmem>>, vector<1x4x8xf32>
    %46 = vector.shape_cast %45 : vector<1x4x8xf32> to vector<4x8xf32>
    %c0_51 = arith.constant 0 : index
    %c1_52 = arith.constant 1 : index
    %c0_53 = arith.constant 0 : index
    %c8_54 = arith.constant 8 : index
    %47 = vector.load %arg3[%c0_51, %c1_52, %c0_53, %c8_54] : memref<1x9x4x64xf32, #tpu.memory_space<vmem>>, vector<1x1x4x8xf32>
    %48 = vector.shape_cast %47 : vector<1x1x4x8xf32> to vector<4x8xf32>
    %49 = vector.shape_cast %46 : vector<4x8xf32> to vector<1x1x4x8xf32>
    tpu.vector_store %arg3[%c0_51, %c1_52, %c0_53, %c8_54], %49 {strides = array<i32>} : memref<1x9x4x64xf32, #tpu.memory_space<vmem>>, vector<1x1x4x8xf32>,
    %c0_55 = arith.constant 0 : index
    %c0_56 = arith.constant 0 : index
    %c36 = arith.constant 36 : index
    %50 = vector.load %arg2[%c0_55, %c0_56, %c36] : memref<1x4x256xf32, #tpu.memory_space<vmem>>, vector<1x4x8xf32>
    %51 = vector.shape_cast %50 : vector<1x4x8xf32> to vector<4x8xf32>
    %c0_57 = arith.constant 0 : index
    %c1_58 = arith.constant 1 : index
    %c0_59 = arith.constant 0 : index
    %c16_60 = arith.constant 16 : index
    %52 = vector.load %arg3[%c0_57, %c1_58, %c0_59, %c16_60] : memref<1x9x4x64xf32, #tpu.memory_space<vmem>>, vector<1x1x4x8xf32>
    %53 = vector.shape_cast %52 : vector<1x1x4x8xf32> to vector<4x8xf32>
    %54 = vector.shape_cast %51 : vector<4x8xf32> to vector<1x1x4x8xf32>
    tpu.vector_store %arg3[%c0_57, %c1_58, %c0_59, %c16_60], %54 {strides = array<i32>} : memref<1x9x4x64xf32, #tpu.memory_space<vmem>>, vector<1x1x4x8xf32>,
    %c0_61 = arith.constant 0 : index
    %c0_62 = arith.constant 0 : index
    %c52 = arith.constant 52 : index
    %55 = vector.load %arg2[%c0_61, %c0_62, %c52] : memref<1x4x256xf32, #tpu.memory_space<vmem>>, vector<1x4x8xf32>
    %56 = vector.shape_cast %55 : vector<1x4x8xf32> to vector<4x8xf32>
    %c0_63 = arith.constant 0 : index
    %c1_64 = arith.constant 1 : index
    %c0_65 = arith.constant 0 : index
    %c24_66 = arith.constant 24 : index
    %57 = vector.load %arg3[%c0_63, %c1_64, %c0_65, %c24_66] : memref<1x9x4x64xf32, #tpu.memory_space<vmem>>, vector<1x1x4x8xf32>
    %58 = vector.shape_cast %57 : vector<1x1x4x8xf32> to vector<4x8xf32>
    %59 = vector.shape_cast %56 : vector<4x8xf32> to vector<1x1x4x8xf32>
    tpu.vector_store %arg3[%c0_63, %c1_64, %c0_65, %c24_66], %59 {strides = array<i32>} : memref<1x9x4x64xf32, #tpu.memory_space<vmem>>, vector<1x1x4x8xf32>,
    %c0_67 = arith.constant 0 : index
    %c0_68 = arith.constant 0 : index
    %c68 = arith.constant 68 : index
    %60 = vector.load %arg2[%c0_67, %c0_68, %c68] : memref<1x4x256xf32, #tpu.memory_space<vmem>>, vector<1x4x8xf32>
    %61 = vector.shape_cast %60 : vector<1x4x8xf32> to vector<4x8xf32>
    %c0_69 = arith.constant 0 : index
    %c1_70 = arith.constant 1 : index
    %c0_71 = arith.constant 0 : index
    %c32_72 = arith.constant 32 : index
    %62 = vector.load %arg3[%c0_69, %c1_70, %c0_71, %c32_72] : memref<1x9x4x64xf32, #tpu.memory_space<vmem>>, vector<1x1x4x8xf32>
    %63 = vector.shape_cast %62 : vector<1x1x4x8xf32> to vector<4x8xf32>
    %64 = vector.shape_cast %61 : vector<4x8xf32> to vector<1x1x4x8xf32>
    tpu.vector_store %arg3[%c0_69, %c1_70, %c0_71, %c32_72], %64 {strides = array<i32>} : memref<1x9x4x64xf32, #tpu.memory_space<vmem>>, vector<1x1x4x8xf32>,
    %c0_73 = arith.constant 0 : index
    %c0_74 = arith.constant 0 : index
    %c84 = arith.constant 84 : index
    %65 = vector.load %arg2[%c0_73, %c0_74, %c84] : memref<1x4x256xf32, #tpu.memory_space<vmem>>, vector<1x4x8xf32>
    %66 = vector.shape_cast %65 : vector<1x4x8xf32> to vector<4x8xf32>
    %c0_75 = arith.constant 0 : index
    %c1_76 = arith.constant 1 : index
    %c0_77 = arith.constant 0 : index
    %c40_78 = arith.constant 40 : index
    %67 = vector.load %arg3[%c0_75, %c1_76, %c0_77, %c40_78] : memref<1x9x4x64xf32, #tpu.memory_space<vmem>>, vector<1x1x4x8xf32>
    %68 = vector.shape_cast %67 : vector<1x1x4x8xf32> to vector<4x8xf32>
    %69 = vector.shape_cast %66 : vector<4x8xf32> to vector<1x1x4x8xf32>
    tpu.vector_store %arg3[%c0_75, %c1_76, %c0_77, %c40_78], %69 {strides = array<i32>} : memref<1x9x4x64xf32, #tpu.memory_space<vmem>>, vector<1x1x4x8xf32>,
    %c0_79 = arith.constant 0 : index
    %c0_80 = arith.constant 0 : index
    %c100 = arith.constant 100 : index
    %70 = vector.load %arg2[%c0_79, %c0_80, %c100] : memref<1x4x256xf32, #tpu.memory_space<vmem>>, vector<1x4x8xf32>
    %71 = vector.shape_cast %70 : vector<1x4x8xf32> to vector<4x8xf32>
    %c0_81 = arith.constant 0 : index
    %c1_82 = arith.constant 1 : index
    %c0_83 = arith.constant 0 : index
    %c48_84 = arith.constant 48 : index
    %72 = vector.load %arg3[%c0_81, %c1_82, %c0_83, %c48_84] : memref<1x9x4x64xf32, #tpu.memory_space<vmem>>, vector<1x1x4x8xf32>
    %73 = vector.shape_cast %72 : vector<1x1x4x8xf32> to vector<4x8xf32>
    %74 = vector.shape_cast %71 : vector<4x8xf32> to vector<1x1x4x8xf32>
    tpu.vector_store %arg3[%c0_81, %c1_82, %c0_83, %c48_84], %74 {strides = array<i32>} : memref<1x9x4x64xf32, #tpu.memory_space<vmem>>, vector<1x1x4x8xf32>,
    %c0_85 = arith.constant 0 : index
    %c0_86 = arith.constant 0 : index
    %c116 = arith.constant 116 : index
    %75 = vector.load %arg2[%c0_85, %c0_86, %c116] : memref<1x4x256xf32, #tpu.memory_space<vmem>>, vector<1x4x8xf32>
    %76 = vector.shape_cast %75 : vector<1x4x8xf32> to vector<4x8xf32>
    %c0_87 = arith.constant 0 : index
    %c1_88 = arith.constant 1 : index
    %c0_89 = arith.constant 0 : index
    %c56_90 = arith.constant 56 : index
    %77 = vector.load %arg3[%c0_87, %c1_88, %c0_89, %c56_90] : memref<1x9x4x64xf32, #tpu.memory_space<vmem>>, vector<1x1x4x8xf32>
    %78 = vector.shape_cast %77 : vector<1x1x4x8xf32> to vector<4x8xf32>
    %79 = vector.shape_cast %76 : vector<4x8xf32> to vector<1x1x4x8xf32>
    tpu.vector_store %arg3[%c0_87, %c1_88, %c0_89, %c56_90], %79 {strides = array<i32>} : memref<1x9x4x64xf32, #tpu.memory_space<vmem>>, vector<1x1x4x8xf32>,
    %c0_91 = arith.constant 0 : index
    %c0_92 = arith.constant 0 : index
    %c8_93 = arith.constant 8 : index
    %80 = vector.load %arg2[%c0_91, %c0_92, %c8_93] : memref<1x4x256xf32, #tpu.memory_space<vmem>>, vector<1x4x8xf32>
    %81 = vector.shape_cast %80 : vector<1x4x8xf32> to vector<4x8xf32>
    %c0_94 = arith.constant 0 : index
    %c2 = arith.constant 2 : index
    %c0_95 = arith.constant 0 : index
    %c0_96 = arith.constant 0 : index
    %82 = vector.load %arg3[%c0_94, %c2, %c0_95, %c0_96] : memref<1x9x4x64xf32, #tpu.memory_space<vmem>>, vector<1x1x4x8xf32>
    %83 = vector.shape_cast %82 : vector<1x1x4x8xf32> to vector<4x8xf32>
    %84 = vector.shape_cast %81 : vector<4x8xf32> to vector<1x1x4x8xf32>
    tpu.vector_store %arg3[%c0_94, %c2, %c0_95, %c0_96], %84 {strides = array<i32>} : memref<1x9x4x64xf32, #tpu.memory_space<vmem>>, vector<1x1x4x8xf32>,
    %c0_97 = arith.constant 0 : index
    %c0_98 = arith.constant 0 : index
    %c24_99 = arith.constant 24 : index
    %85 = vector.load %arg2[%c0_97, %c0_98, %c24_99] : memref<1x4x256xf32, #tpu.memory_space<vmem>>, vector<1x4x8xf32>
    %86 = vector.shape_cast %85 : vector<1x4x8xf32> to vector<4x8xf32>
    %c0_100 = arith.constant 0 : index
    %c2_101 = arith.constant 2 : index
    %c0_102 = arith.constant 0 : index
    %c8_103 = arith.constant 8 : index
    %87 = vector.load %arg3[%c0_100, %c2_101, %c0_102, %c8_103] : memref<1x9x4x64xf32, #tpu.memory_space<vmem>>, vector<1x1x4x8xf32>
    %88 = vector.shape_cast %87 : vector<1x1x4x8xf32> to vector<4x8xf32>
    %89 = vector.shape_cast %86 : vector<4x8xf32> to vector<1x1x4x8xf32>
    tpu.vector_store %arg3[%c0_100, %c2_101, %c0_102, %c8_103], %89 {strides = array<i32>} : memref<1x9x4x64xf32, #tpu.memory_space<vmem>>, vector<1x1x4x8xf32>,
    %c0_104 = arith.constant 0 : index
    %c0_105 = arith.constant 0 : index
    %c40_106 = arith.constant 40 : index
    %90 = vector.load %arg2[%c0_104, %c0_105, %c40_106] : memref<1x4x256xf32, #tpu.memory_space<vmem>>, vector<1x4x8xf32>
    %91 = vector.shape_cast %90 : vector<1x4x8xf32> to vector<4x8xf32>
    %c0_107 = arith.constant 0 : index
    %c2_108 = arith.constant 2 : index
    %c0_109 = arith.constant 0 : index
    %c16_110 = arith.constant 16 : index
    %92 = vector.load %arg3[%c0_107, %c2_108, %c0_109, %c16_110] : memref<1x9x4x64xf32, #tpu.memory_space<vmem>>, vector<1x1x4x8xf32>
    %93 = vector.shape_cast %92 : vector<1x1x4x8xf32> to vector<4x8xf32>
    %94 = vector.shape_cast %91 : vector<4x8xf32> to vector<1x1x4x8xf32>
    tpu.vector_store %arg3[%c0_107, %c2_108, %c0_109, %c16_110], %94 {strides = array<i32>} : memref<1x9x4x64xf32, #tpu.memory_space<vmem>>, vector<1x1x4x8xf32>,
    %c0_111 = arith.constant 0 : index
    %c0_112 = arith.constant 0 : index
    %c56_113 = arith.constant 56 : index
    %95 = vector.load %arg2[%c0_111, %c0_112, %c56_113] : memref<1x4x256xf32, #tpu.memory_space<vmem>>, vector<1x4x8xf32>
    %96 = vector.shape_cast %95 : vector<1x4x8xf32> to vector<4x8xf32>
    %c0_114 = arith.constant 0 : index
    %c2_115 = arith.constant 2 : index
    %c0_116 = arith.constant 0 : index
    %c24_117 = arith.constant 24 : index
    %97 = vector.load %arg3[%c0_114, %c2_115, %c0_116, %c24_117] : memref<1x9x4x64xf32, #tpu.memory_space<vmem>>, vector<1x1x4x8xf32>
    %98 = vector.shape_cast %97 : vector<1x1x4x8xf32> to vector<4x8xf32>
    %99 = vector.shape_cast %96 : vector<4x8xf32> to vector<1x1x4x8xf32>
    tpu.vector_store %arg3[%c0_114, %c2_115, %c0_116, %c24_117], %99 {strides = array<i32>} : memref<1x9x4x64xf32, #tpu.memory_space<vmem>>, vector<1x1x4x8xf32>,
    %c0_118 = arith.constant 0 : index
    %c0_119 = arith.constant 0 : index
    %c72 = arith.constant 72 : index
    %100 = vector.load %arg2[%c0_118, %c0_119, %c72] : memref<1x4x256xf32, #tpu.memory_space<vmem>>, vector<1x4x8xf32>
    %101 = vector.shape_cast %100 : vector<1x4x8xf32> to vector<4x8xf32>
    %c0_120 = arith.constant 0 : index
    %c2_121 = arith.constant 2 : index
    %c0_122 = arith.constant 0 : index
    %c32_123 = arith.constant 32 : index
    %102 = vector.load %arg3[%c0_120, %c2_121, %c0_122, %c32_123] : memref<1x9x4x64xf32, #tpu.memory_space<vmem>>, vector<1x1x4x8xf32>
    %103 = vector.shape_cast %102 : vector<1x1x4x8xf32> to vector<4x8xf32>
    %104 = vector.shape_cast %101 : vector<4x8xf32> to vector<1x1x4x8xf32>
    tpu.vector_store %arg3[%c0_120, %c2_121, %c0_122, %c32_123], %104 {strides = array<i32>} : memref<1x9x4x64xf32, #tpu.memory_space<vmem>>, vector<1x1x4x8xf32>,
    %c0_124 = arith.constant 0 : index
    %c0_125 = arith.constant 0 : index
    %c88 = arith.constant 88 : index
    %105 = vector.load %arg2[%c0_124, %c0_125, %c88] : memref<1x4x256xf32, #tpu.memory_space<vmem>>, vector<1x4x8xf32>
    %106 = vector.shape_cast %105 : vector<1x4x8xf32> to vector<4x8xf32>
    %c0_126 = arith.constant 0 : index
    %c2_127 = arith.constant 2 : index
    %c0_128 = arith.constant 0 : index
    %c40_129 = arith.constant 40 : index
    %107 = vector.load %arg3[%c0_126, %c2_127, %c0_128, %c40_129] : memref<1x9x4x64xf32, #tpu.memory_space<vmem>>, vector<1x1x4x8xf32>
    %108 = vector.shape_cast %107 : vector<1x1x4x8xf32> to vector<4x8xf32>
    %109 = vector.shape_cast %106 : vector<4x8xf32> to vector<1x1x4x8xf32>
    tpu.vector_store %arg3[%c0_126, %c2_127, %c0_128, %c40_129], %109 {strides = array<i32>} : memref<1x9x4x64xf32, #tpu.memory_space<vmem>>, vector<1x1x4x8xf32>,
    %c0_130 = arith.constant 0 : index
    %c0_131 = arith.constant 0 : index
    %c104 = arith.constant 104 : index
    %110 = vector.load %arg2[%c0_130, %c0_131, %c104] : memref<1x4x256xf32, #tpu.memory_space<vmem>>, vector<1x4x8xf32>
    %111 = vector.shape_cast %110 : vector<1x4x8xf32> to vector<4x8xf32>
    %c0_132 = arith.constant 0 : index
    %c2_133 = arith.constant 2 : index
    %c0_134 = arith.constant 0 : index
    %c48_135 = arith.constant 48 : index
    %112 = vector.load %arg3[%c0_132, %c2_133, %c0_134, %c48_135] : memref<1x9x4x64xf32, #tpu.memory_space<vmem>>, vector<1x1x4x8xf32>
    %113 = vector.shape_cast %112 : vector<1x1x4x8xf32> to vector<4x8xf32>
    %114 = vector.shape_cast %111 : vector<4x8xf32> to vector<1x1x4x8xf32>
    tpu.vector_store %arg3[%c0_132, %c2_133, %c0_134, %c48_135], %114 {strides = array<i32>} : memref<1x9x4x64xf32, #tpu.memory_space<vmem>>, vector<1x1x4x8xf32>,
    %c0_136 = arith.constant 0 : index
    %c0_137 = arith.constant 0 : index
    %c120 = arith.constant 120 : index
    %115 = vector.load %arg2[%c0_136, %c0_137, %c120] : memref<1x4x256xf32, #tpu.memory_space<vmem>>, vector<1x4x8xf32>
    %116 = vector.shape_cast %115 : vector<1x4x8xf32> to vector<4x8xf32>
    %c0_138 = arith.constant 0 : index
    %c2_139 = arith.constant 2 : index
    %c0_140 = arith.constant 0 : index
    %c56_141 = arith.constant 56 : index
    %117 = vector.load %arg3[%c0_138, %c2_139, %c0_140, %c56_141] : memref<1x9x4x64xf32, #tpu.memory_space<vmem>>, vector<1x1x4x8xf32>
    %118 = vector.shape_cast %117 : vector<1x1x4x8xf32> to vector<4x8xf32>
    %119 = vector.shape_cast %116 : vector<4x8xf32> to vector<1x1x4x8xf32>
    tpu.vector_store %arg3[%c0_138, %c2_139, %c0_140, %c56_141], %119 {strides = array<i32>} : memref<1x9x4x64xf32, #tpu.memory_space<vmem>>, vector<1x1x4x8xf32>,
    %c0_142 = arith.constant 0 : index
    %c0_143 = arith.constant 0 : index
    %c64_144 = arith.constant 64 : index
    %120 = vector.load %arg2[%c0_142, %c0_143, %c64_144] : memref<1x4x256xf32, #tpu.memory_space<vmem>>, vector<1x4x8xf32>
    %121 = vector.shape_cast %120 : vector<1x4x8xf32> to vector<4x8xf32>
    %c0_145 = arith.constant 0 : index
    %c3 = arith.constant 3 : index
    %c0_146 = arith.constant 0 : index
    %c0_147 = arith.constant 0 : index
    %122 = vector.load %arg3[%c0_145, %c3, %c0_146, %c0_147] : memref<1x9x4x64xf32, #tpu.memory_space<vmem>>, vector<1x1x4x8xf32>
    %123 = vector.shape_cast %122 : vector<1x1x4x8xf32> to vector<4x8xf32>
    %124 = vector.shape_cast %121 : vector<4x8xf32> to vector<1x1x4x8xf32>
    tpu.vector_store %arg3[%c0_145, %c3, %c0_146, %c0_147], %124 {strides = array<i32>} : memref<1x9x4x64xf32, #tpu.memory_space<vmem>>, vector<1x1x4x8xf32>,
    %c0_148 = arith.constant 0 : index
    %c0_149 = arith.constant 0 : index
    %c80_150 = arith.constant 80 : index
    %125 = vector.load %arg2[%c0_148, %c0_149, %c80_150] : memref<1x4x256xf32, #tpu.memory_space<vmem>>, vector<1x4x8xf32>
    %126 = vector.shape_cast %125 : vector<1x4x8xf32> to vector<4x8xf32>
    %c0_151 = arith.constant 0 : index
    %c3_152 = arith.constant 3 : index
    %c0_153 = arith.constant 0 : index
    %c8_154 = arith.constant 8 : index
    %127 = vector.load %arg3[%c0_151, %c3_152, %c0_153, %c8_154] : memref<1x9x4x64xf32, #tpu.memory_space<vmem>>, vector<1x1x4x8xf32>
    %128 = vector.shape_cast %127 : vector<1x1x4x8xf32> to vector<4x8xf32>
    %129 = vector.shape_cast %126 : vector<4x8xf32> to vector<1x1x4x8xf32>
    tpu.vector_store %arg3[%c0_151, %c3_152, %c0_153, %c8_154], %129 {strides = array<i32>} : memref<1x9x4x64xf32, #tpu.memory_space<vmem>>, vector<1x1x4x8xf32>,
    %c0_155 = arith.constant 0 : index
    %c0_156 = arith.constant 0 : index
    %c96_157 = arith.constant 96 : index
    %130 = vector.load %arg2[%c0_155, %c0_156, %c96_157] : memref<1x4x256xf32, #tpu.memory_space<vmem>>, vector<1x4x8xf32>
    %131 = vector.shape_cast %130 : vector<1x4x8xf32> to vector<4x8xf32>
    %c0_158 = arith.constant 0 : index
    %c3_159 = arith.constant 3 : index
    %c0_160 = arith.constant 0 : index
    %c16_161 = arith.constant 16 : index
    %132 = vector.load %arg3[%c0_158, %c3_159, %c0_160, %c16_161] : memref<1x9x4x64xf32, #tpu.memory_space<vmem>>, vector<1x1x4x8xf32>
    %133 = vector.shape_cast %132 : vector<1x1x4x8xf32> to vector<4x8xf32>
    %134 = vector.shape_cast %131 : vector<4x8xf32> to vector<1x1x4x8xf32>
    tpu.vector_store %arg3[%c0_158, %c3_159, %c0_160, %c16_161], %134 {strides = array<i32>} : memref<1x9x4x64xf32, #tpu.memory_space<vmem>>, vector<1x1x4x8xf32>,
    %c0_162 = arith.constant 0 : index
    %c0_163 = arith.constant 0 : index
    %c112_164 = arith.constant 112 : index
    %135 = vector.load %arg2[%c0_162, %c0_163, %c112_164] : memref<1x4x256xf32, #tpu.memory_space<vmem>>, vector<1x4x8xf32>
    %136 = vector.shape_cast %135 : vector<1x4x8xf32> to vector<4x8xf32>
    %c0_165 = arith.constant 0 : index
    %c3_166 = arith.constant 3 : index
    %c0_167 = arith.constant 0 : index
    %c24_168 = arith.constant 24 : index
    %137 = vector.load %arg3[%c0_165, %c3_166, %c0_167, %c24_168] : memref<1x9x4x64xf32, #tpu.memory_space<vmem>>, vector<1x1x4x8xf32>
    %138 = vector.shape_cast %137 : vector<1x1x4x8xf32> to vector<4x8xf32>
    %139 = vector.shape_cast %136 : vector<4x8xf32> to vector<1x1x4x8xf32>
    tpu.vector_store %arg3[%c0_165, %c3_166, %c0_167, %c24_168], %139 {strides = array<i32>} : memref<1x9x4x64xf32, #tpu.memory_space<vmem>>, vector<1x1x4x8xf32>,
    %c0_169 = arith.constant 0 : index
    %c0_170 = arith.constant 0 : index
    %c128 = arith.constant 128 : index
    %140 = vector.load %arg2[%c0_169, %c0_170, %c128] : memref<1x4x256xf32, #tpu.memory_space<vmem>>, vector<1x4x8xf32>
    %141 = vector.shape_cast %140 : vector<1x4x8xf32> to vector<4x8xf32>
    %c0_171 = arith.constant 0 : index
    %c3_172 = arith.constant 3 : index
    %c0_173 = arith.constant 0 : index
    %c32_174 = arith.constant 32 : index
    %142 = vector.load %arg3[%c0_171, %c3_172, %c0_173, %c32_174] : memref<1x9x4x64xf32, #tpu.memory_space<vmem>>, vector<1x1x4x8xf32>
    %143 = vector.shape_cast %142 : vector<1x1x4x8xf32> to vector<4x8xf32>
    %144 = vector.shape_cast %141 : vector<4x8xf32> to vector<1x1x4x8xf32>
    tpu.vector_store %arg3[%c0_171, %c3_172, %c0_173, %c32_174], %144 {strides = array<i32>} : memref<1x9x4x64xf32, #tpu.memory_space<vmem>>, vector<1x1x4x8xf32>,
    %c0_175 = arith.constant 0 : index
    %c0_176 = arith.constant 0 : index
    %c144 = arith.constant 144 : index
    %145 = vector.load %arg2[%c0_175, %c0_176, %c144] : memref<1x4x256xf32, #tpu.memory_space<vmem>>, vector<1x4x8xf32>
    %146 = vector.shape_cast %145 : vector<1x4x8xf32> to vector<4x8xf32>
    %c0_177 = arith.constant 0 : index
    %c3_178 = arith.constant 3 : index
    %c0_179 = arith.constant 0 : index
    %c40_180 = arith.constant 40 : index
    %147 = vector.load %arg3[%c0_177, %c3_178, %c0_179, %c40_180] : memref<1x9x4x64xf32, #tpu.memory_space<vmem>>, vector<1x1x4x8xf32>
    %148 = vector.shape_cast %147 : vector<1x1x4x8xf32> to vector<4x8xf32>
    %149 = vector.shape_cast %146 : vector<4x8xf32> to vector<1x1x4x8xf32>
    tpu.vector_store %arg3[%c0_177, %c3_178, %c0_179, %c40_180], %149 {strides = array<i32>} : memref<1x9x4x64xf32, #tpu.memory_space<vmem>>, vector<1x1x4x8xf32>,
    %c0_181 = arith.constant 0 : index
    %c0_182 = arith.constant 0 : index
    %c160 = arith.constant 160 : index
    %150 = vector.load %arg2[%c0_181, %c0_182, %c160] : memref<1x4x256xf32, #tpu.memory_space<vmem>>, vector<1x4x8xf32>
    %151 = vector.shape_cast %150 : vector<1x4x8xf32> to vector<4x8xf32>
    %c0_183 = arith.constant 0 : index
    %c3_184 = arith.constant 3 : index
    %c0_185 = arith.constant 0 : index
    %c48_186 = arith.constant 48 : index
    %152 = vector.load %arg3[%c0_183, %c3_184, %c0_185, %c48_186] : memref<1x9x4x64xf32, #tpu.memory_space<vmem>>, vector<1x1x4x8xf32>
    %153 = vector.shape_cast %152 : vector<1x1x4x8xf32> to vector<4x8xf32>
    %154 = vector.shape_cast %151 : vector<4x8xf32> to vector<1x1x4x8xf32>
    tpu.vector_store %arg3[%c0_183, %c3_184, %c0_185, %c48_186], %154 {strides = array<i32>} : memref<1x9x4x64xf32, #tpu.memory_space<vmem>>, vector<1x1x4x8xf32>,
    %c0_187 = arith.constant 0 : index
    %c0_188 = arith.constant 0 : index
    %c176 = arith.constant 176 : index
    %155 = vector.load %arg2[%c0_187, %c0_188, %c176] : memref<1x4x256xf32, #tpu.memory_space<vmem>>, vector<1x4x8xf32>
    %156 = vector.shape_cast %155 : vector<1x4x8xf32> to vector<4x8xf32>
    %c0_189 = arith.constant 0 : index
    %c3_190 = arith.constant 3 : index
    %c0_191 = arith.constant 0 : index
    %c56_192 = arith.constant 56 : index
    %157 = vector.load %arg3[%c0_189, %c3_190, %c0_191, %c56_192] : memref<1x9x4x64xf32, #tpu.memory_space<vmem>>, vector<1x1x4x8xf32>
    %158 = vector.shape_cast %157 : vector<1x1x4x8xf32> to vector<4x8xf32>
    %159 = vector.shape_cast %156 : vector<4x8xf32> to vector<1x1x4x8xf32>
    tpu.vector_store %arg3[%c0_189, %c3_190, %c0_191, %c56_192], %159 {strides = array<i32>} : memref<1x9x4x64xf32, #tpu.memory_space<vmem>>, vector<1x1x4x8xf32>,
    %c0_193 = arith.constant 0 : index
    %c0_194 = arith.constant 0 : index
    %c68_195 = arith.constant 68 : index
    %160 = vector.load %arg2[%c0_193, %c0_194, %c68_195] : memref<1x4x256xf32, #tpu.memory_space<vmem>>, vector<1x4x8xf32>
    %161 = vector.shape_cast %160 : vector<1x4x8xf32> to vector<4x8xf32>
    %c0_196 = arith.constant 0 : index
    %c4_197 = arith.constant 4 : index
    %c0_198 = arith.constant 0 : index
    %c0_199 = arith.constant 0 : index
    %162 = vector.load %arg3[%c0_196, %c4_197, %c0_198, %c0_199] : memref<1x9x4x64xf32, #tpu.memory_space<vmem>>, vector<1x1x4x8xf32>
    %163 = vector.shape_cast %162 : vector<1x1x4x8xf32> to vector<4x8xf32>
    %164 = vector.shape_cast %161 : vector<4x8xf32> to vector<1x1x4x8xf32>
    tpu.vector_store %arg3[%c0_196, %c4_197, %c0_198, %c0_199], %164 {strides = array<i32>} : memref<1x9x4x64xf32, #tpu.memory_space<vmem>>, vector<1x1x4x8xf32>,
    %c0_200 = arith.constant 0 : index
    %c0_201 = arith.constant 0 : index
    %c84_202 = arith.constant 84 : index
    %165 = vector.load %arg2[%c0_200, %c0_201, %c84_202] : memref<1x4x256xf32, #tpu.memory_space<vmem>>, vector<1x4x8xf32>
    %166 = vector.shape_cast %165 : vector<1x4x8xf32> to vector<4x8xf32>
    %c0_203 = arith.constant 0 : index
    %c4_204 = arith.constant 4 : index
    %c0_205 = arith.constant 0 : index
    %c8_206 = arith.constant 8 : index
    %167 = vector.load %arg3[%c0_203, %c4_204, %c0_205, %c8_206] : memref<1x9x4x64xf32, #tpu.memory_space<vmem>>, vector<1x1x4x8xf32>
    %168 = vector.shape_cast %167 : vector<1x1x4x8xf32> to vector<4x8xf32>
    %169 = vector.shape_cast %166 : vector<4x8xf32> to vector<1x1x4x8xf32>
    tpu.vector_store %arg3[%c0_203, %c4_204, %c0_205, %c8_206], %169 {strides = array<i32>} : memref<1x9x4x64xf32, #tpu.memory_space<vmem>>, vector<1x1x4x8xf32>,
    %c0_207 = arith.constant 0 : index
    %c0_208 = arith.constant 0 : index
    %c100_209 = arith.constant 100 : index
    %170 = vector.load %arg2[%c0_207, %c0_208, %c100_209] : memref<1x4x256xf32, #tpu.memory_space<vmem>>, vector<1x4x8xf32>
    %171 = vector.shape_cast %170 : vector<1x4x8xf32> to vector<4x8xf32>
    %c0_210 = arith.constant 0 : index
    %c4_211 = arith.constant 4 : index
    %c0_212 = arith.constant 0 : index
    %c16_213 = arith.constant 16 : index
    %172 = vector.load %arg3[%c0_210, %c4_211, %c0_212, %c16_213] : memref<1x9x4x64xf32, #tpu.memory_space<vmem>>, vector<1x1x4x8xf32>
    %173 = vector.shape_cast %172 : vector<1x1x4x8xf32> to vector<4x8xf32>
    %174 = vector.shape_cast %171 : vector<4x8xf32> to vector<1x1x4x8xf32>
    tpu.vector_store %arg3[%c0_210, %c4_211, %c0_212, %c16_213], %174 {strides = array<i32>} : memref<1x9x4x64xf32, #tpu.memory_space<vmem>>, vector<1x1x4x8xf32>,
    %c0_214 = arith.constant 0 : index
    %c0_215 = arith.constant 0 : index
    %c116_216 = arith.constant 116 : index
    %175 = vector.load %arg2[%c0_214, %c0_215, %c116_216] : memref<1x4x256xf32, #tpu.memory_space<vmem>>, vector<1x4x8xf32>
    %176 = vector.shape_cast %175 : vector<1x4x8xf32> to vector<4x8xf32>
    %c0_217 = arith.constant 0 : index
    %c4_218 = arith.constant 4 : index
    %c0_219 = arith.constant 0 : index
    %c24_220 = arith.constant 24 : index
    %177 = vector.load %arg3[%c0_217, %c4_218, %c0_219, %c24_220] : memref<1x9x4x64xf32, #tpu.memory_space<vmem>>, vector<1x1x4x8xf32>
    %178 = vector.shape_cast %177 : vector<1x1x4x8xf32> to vector<4x8xf32>
    %179 = vector.shape_cast %176 : vector<4x8xf32> to vector<1x1x4x8xf32>
    tpu.vector_store %arg3[%c0_217, %c4_218, %c0_219, %c24_220], %179 {strides = array<i32>} : memref<1x9x4x64xf32, #tpu.memory_space<vmem>>, vector<1x1x4x8xf32>,
    %c0_221 = arith.constant 0 : index
    %c0_222 = arith.constant 0 : index
    %c132 = arith.constant 132 : index
    %180 = vector.load %arg2[%c0_221, %c0_222, %c132] : memref<1x4x256xf32, #tpu.memory_space<vmem>>, vector<1x4x8xf32>
    %181 = vector.shape_cast %180 : vector<1x4x8xf32> to vector<4x8xf32>
    %c0_223 = arith.constant 0 : index
    %c4_224 = arith.constant 4 : index
    %c0_225 = arith.constant 0 : index
    %c32_226 = arith.constant 32 : index
    %182 = vector.load %arg3[%c0_223, %c4_224, %c0_225, %c32_226] : memref<1x9x4x64xf32, #tpu.memory_space<vmem>>, vector<1x1x4x8xf32>
    %183 = vector.shape_cast %182 : vector<1x1x4x8xf32> to vector<4x8xf32>
    %184 = vector.shape_cast %181 : vector<4x8xf32> to vector<1x1x4x8xf32>
    tpu.vector_store %arg3[%c0_223, %c4_224, %c0_225, %c32_226], %184 {strides = array<i32>} : memref<1x9x4x64xf32, #tpu.memory_space<vmem>>, vector<1x1x4x8xf32>,
    %c0_227 = arith.constant 0 : index
    %c0_228 = arith.constant 0 : index
    %c148 = arith.constant 148 : index
    %185 = vector.load %arg2[%c0_227, %c0_228, %c148] : memref<1x4x256xf32, #tpu.memory_space<vmem>>, vector<1x4x8xf32>
    %186 = vector.shape_cast %185 : vector<1x4x8xf32> to vector<4x8xf32>
    %c0_229 = arith.constant 0 : index
    %c4_230 = arith.constant 4 : index
    %c0_231 = arith.constant 0 : index
    %c40_232 = arith.constant 40 : index
    %187 = vector.load %arg3[%c0_229, %c4_230, %c0_231, %c40_232] : memref<1x9x4x64xf32, #tpu.memory_space<vmem>>, vector<1x1x4x8xf32>
    %188 = vector.shape_cast %187 : vector<1x1x4x8xf32> to vector<4x8xf32>
    %189 = vector.shape_cast %186 : vector<4x8xf32> to vector<1x1x4x8xf32>
    tpu.vector_store %arg3[%c0_229, %c4_230, %c0_231, %c40_232], %189 {strides = array<i32>} : memref<1x9x4x64xf32, #tpu.memory_space<vmem>>, vector<1x1x4x8xf32>,
    %c0_233 = arith.constant 0 : index
    %c0_234 = arith.constant 0 : index
    %c164 = arith.constant 164 : index
    %190 = vector.load %arg2[%c0_233, %c0_234, %c164] : memref<1x4x256xf32, #tpu.memory_space<vmem>>, vector<1x4x8xf32>
    %191 = vector.shape_cast %190 : vector<1x4x8xf32> to vector<4x8xf32>
    %c0_235 = arith.constant 0 : index
    %c4_236 = arith.constant 4 : index
    %c0_237 = arith.constant 0 : index
    %c48_238 = arith.constant 48 : index
    %192 = vector.load %arg3[%c0_235, %c4_236, %c0_237, %c48_238] : memref<1x9x4x64xf32, #tpu.memory_space<vmem>>, vector<1x1x4x8xf32>
    %193 = vector.shape_cast %192 : vector<1x1x4x8xf32> to vector<4x8xf32>
    %194 = vector.shape_cast %191 : vector<4x8xf32> to vector<1x1x4x8xf32>
    tpu.vector_store %arg3[%c0_235, %c4_236, %c0_237, %c48_238], %194 {strides = array<i32>} : memref<1x9x4x64xf32, #tpu.memory_space<vmem>>, vector<1x1x4x8xf32>,
    %c0_239 = arith.constant 0 : index
    %c0_240 = arith.constant 0 : index
    %c180 = arith.constant 180 : index
    %195 = vector.load %arg2[%c0_239, %c0_240, %c180] : memref<1x4x256xf32, #tpu.memory_space<vmem>>, vector<1x4x8xf32>
    %196 = vector.shape_cast %195 : vector<1x4x8xf32> to vector<4x8xf32>
    %c0_241 = arith.constant 0 : index
    %c4_242 = arith.constant 4 : index
    %c0_243 = arith.constant 0 : index
    %c56_244 = arith.constant 56 : index
    %197 = vector.load %arg3[%c0_241, %c4_242, %c0_243, %c56_244] : memref<1x9x4x64xf32, #tpu.memory_space<vmem>>, vector<1x1x4x8xf32>
    %198 = vector.shape_cast %197 : vector<1x1x4x8xf32> to vector<4x8xf32>
    %199 = vector.shape_cast %196 : vector<4x8xf32> to vector<1x1x4x8xf32>
    tpu.vector_store %arg3[%c0_241, %c4_242, %c0_243, %c56_244], %199 {strides = array<i32>} : memref<1x9x4x64xf32, #tpu.memory_space<vmem>>, vector<1x1x4x8xf32>,
    %c0_245 = arith.constant 0 : index
    %c0_246 = arith.constant 0 : index
    %c72_247 = arith.constant 72 : index
    %200 = vector.load %arg2[%c0_245, %c0_246, %c72_247] : memref<1x4x256xf32, #tpu.memory_space<vmem>>, vector<1x4x8xf32>
    %201 = vector.shape_cast %200 : vector<1x4x8xf32> to vector<4x8xf32>
    %c0_248 = arith.constant 0 : index
    %c5 = arith.constant 5 : index
    %c0_249 = arith.constant 0 : index
    %c0_250 = arith.constant 0 : index
    %202 = vector.load %arg3[%c0_248, %c5, %c0_249, %c0_250] : memref<1x9x4x64xf32, #tpu.memory_space<vmem>>, vector<1x1x4x8xf32>
    %203 = vector.shape_cast %202 : vector<1x1x4x8xf32> to vector<4x8xf32>
    %204 = vector.shape_cast %201 : vector<4x8xf32> to vector<1x1x4x8xf32>
    tpu.vector_store %arg3[%c0_248, %c5, %c0_249, %c0_250], %204 {strides = array<i32>} : memref<1x9x4x64xf32, #tpu.memory_space<vmem>>, vector<1x1x4x8xf32>,
    %c0_251 = arith.constant 0 : index
    %c0_252 = arith.constant 0 : index
    %c88_253 = arith.constant 88 : index
    %205 = vector.load %arg2[%c0_251, %c0_252, %c88_253] : memref<1x4x256xf32, #tpu.memory_space<vmem>>, vector<1x4x8xf32>
    %206 = vector.shape_cast %205 : vector<1x4x8xf32> to vector<4x8xf32>
    %c0_254 = arith.constant 0 : index
    %c5_255 = arith.constant 5 : index
    %c0_256 = arith.constant 0 : index
    %c8_257 = arith.constant 8 : index
    %207 = vector.load %arg3[%c0_254, %c5_255, %c0_256, %c8_257] : memref<1x9x4x64xf32, #tpu.memory_space<vmem>>, vector<1x1x4x8xf32>
    %208 = vector.shape_cast %207 : vector<1x1x4x8xf32> to vector<4x8xf32>
    %209 = vector.shape_cast %206 : vector<4x8xf32> to vector<1x1x4x8xf32>
    tpu.vector_store %arg3[%c0_254, %c5_255, %c0_256, %c8_257], %209 {strides = array<i32>} : memref<1x9x4x64xf32, #tpu.memory_space<vmem>>, vector<1x1x4x8xf32>,
    %c0_258 = arith.constant 0 : index
    %c0_259 = arith.constant 0 : index
    %c104_260 = arith.constant 104 : index
    %210 = vector.load %arg2[%c0_258, %c0_259, %c104_260] : memref<1x4x256xf32, #tpu.memory_space<vmem>>, vector<1x4x8xf32>
    %211 = vector.shape_cast %210 : vector<1x4x8xf32> to vector<4x8xf32>
    %c0_261 = arith.constant 0 : index
    %c5_262 = arith.constant 5 : index
    %c0_263 = arith.constant 0 : index
    %c16_264 = arith.constant 16 : index
    %212 = vector.load %arg3[%c0_261, %c5_262, %c0_263, %c16_264] : memref<1x9x4x64xf32, #tpu.memory_space<vmem>>, vector<1x1x4x8xf32>
    %213 = vector.shape_cast %212 : vector<1x1x4x8xf32> to vector<4x8xf32>
    %214 = vector.shape_cast %211 : vector<4x8xf32> to vector<1x1x4x8xf32>
    tpu.vector_store %arg3[%c0_261, %c5_262, %c0_263, %c16_264], %214 {strides = array<i32>} : memref<1x9x4x64xf32, #tpu.memory_space<vmem>>, vector<1x1x4x8xf32>,
    %c0_265 = arith.constant 0 : index
    %c0_266 = arith.constant 0 : index
    %c120_267 = arith.constant 120 : index
    %215 = vector.load %arg2[%c0_265, %c0_266, %c120_267] : memref<1x4x256xf32, #tpu.memory_space<vmem>>, vector<1x4x8xf32>
    %216 = vector.shape_cast %215 : vector<1x4x8xf32> to vector<4x8xf32>
    %c0_268 = arith.constant 0 : index
    %c5_269 = arith.constant 5 : index
    %c0_270 = arith.constant 0 : index
    %c24_271 = arith.constant 24 : index
    %217 = vector.load %arg3[%c0_268, %c5_269, %c0_270, %c24_271] : memref<1x9x4x64xf32, #tpu.memory_space<vmem>>, vector<1x1x4x8xf32>
    %218 = vector.shape_cast %217 : vector<1x1x4x8xf32> to vector<4x8xf32>
    %219 = vector.shape_cast %216 : vector<4x8xf32> to vector<1x1x4x8xf32>
    tpu.vector_store %arg3[%c0_268, %c5_269, %c0_270, %c24_271], %219 {strides = array<i32>} : memref<1x9x4x64xf32, #tpu.memory_space<vmem>>, vector<1x1x4x8xf32>,
    %c0_272 = arith.constant 0 : index
    %c0_273 = arith.constant 0 : index
    %c136 = arith.constant 136 : index
    %220 = vector.load %arg2[%c0_272, %c0_273, %c136] : memref<1x4x256xf32, #tpu.memory_space<vmem>>, vector<1x4x8xf32>
    %221 = vector.shape_cast %220 : vector<1x4x8xf32> to vector<4x8xf32>
    %c0_274 = arith.constant 0 : index
    %c5_275 = arith.constant 5 : index
    %c0_276 = arith.constant 0 : index
    %c32_277 = arith.constant 32 : index
    %222 = vector.load %arg3[%c0_274, %c5_275, %c0_276, %c32_277] : memref<1x9x4x64xf32, #tpu.memory_space<vmem>>, vector<1x1x4x8xf32>
    %223 = vector.shape_cast %222 : vector<1x1x4x8xf32> to vector<4x8xf32>
    %224 = vector.shape_cast %221 : vector<4x8xf32> to vector<1x1x4x8xf32>
    tpu.vector_store %arg3[%c0_274, %c5_275, %c0_276, %c32_277], %224 {strides = array<i32>} : memref<1x9x4x64xf32, #tpu.memory_space<vmem>>, vector<1x1x4x8xf32>,
    %c0_278 = arith.constant 0 : index
    %c0_279 = arith.constant 0 : index
    %c152 = arith.constant 152 : index
    %225 = vector.load %arg2[%c0_278, %c0_279, %c152] : memref<1x4x256xf32, #tpu.memory_space<vmem>>, vector<1x4x8xf32>
    %226 = vector.shape_cast %225 : vector<1x4x8xf32> to vector<4x8xf32>
    %c0_280 = arith.constant 0 : index
    %c5_281 = arith.constant 5 : index
    %c0_282 = arith.constant 0 : index
    %c40_283 = arith.constant 40 : index
    %227 = vector.load %arg3[%c0_280, %c5_281, %c0_282, %c40_283] : memref<1x9x4x64xf32, #tpu.memory_space<vmem>>, vector<1x1x4x8xf32>
    %228 = vector.shape_cast %227 : vector<1x1x4x8xf32> to vector<4x8xf32>
    %229 = vector.shape_cast %226 : vector<4x8xf32> to vector<1x1x4x8xf32>
    tpu.vector_store %arg3[%c0_280, %c5_281, %c0_282, %c40_283], %229 {strides = array<i32>} : memref<1x9x4x64xf32, #tpu.memory_space<vmem>>, vector<1x1x4x8xf32>,
    %c0_284 = arith.constant 0 : index
    %c0_285 = arith.constant 0 : index
    %c168 = arith.constant 168 : index
    %230 = vector.load %arg2[%c0_284, %c0_285, %c168] : memref<1x4x256xf32, #tpu.memory_space<vmem>>, vector<1x4x8xf32>
    %231 = vector.shape_cast %230 : vector<1x4x8xf32> to vector<4x8xf32>
    %c0_286 = arith.constant 0 : index
    %c5_287 = arith.constant 5 : index
    %c0_288 = arith.constant 0 : index
    %c48_289 = arith.constant 48 : index
    %232 = vector.load %arg3[%c0_286, %c5_287, %c0_288, %c48_289] : memref<1x9x4x64xf32, #tpu.memory_space<vmem>>, vector<1x1x4x8xf32>
    %233 = vector.shape_cast %232 : vector<1x1x4x8xf32> to vector<4x8xf32>
    %234 = vector.shape_cast %231 : vector<4x8xf32> to vector<1x1x4x8xf32>
    tpu.vector_store %arg3[%c0_286, %c5_287, %c0_288, %c48_289], %234 {strides = array<i32>} : memref<1x9x4x64xf32, #tpu.memory_space<vmem>>, vector<1x1x4x8xf32>,
    %c0_290 = arith.constant 0 : index
    %c0_291 = arith.constant 0 : index
    %c184 = arith.constant 184 : index
    %235 = vector.load %arg2[%c0_290, %c0_291, %c184] : memref<1x4x256xf32, #tpu.memory_space<vmem>>, vector<1x4x8xf32>
    %236 = vector.shape_cast %235 : vector<1x4x8xf32> to vector<4x8xf32>
    %c0_292 = arith.constant 0 : index
    %c5_293 = arith.constant 5 : index
    %c0_294 = arith.constant 0 : index
    %c56_295 = arith.constant 56 : index
    %237 = vector.load %arg3[%c0_292, %c5_293, %c0_294, %c56_295] : memref<1x9x4x64xf32, #tpu.memory_space<vmem>>, vector<1x1x4x8xf32>
    %238 = vector.shape_cast %237 : vector<1x1x4x8xf32> to vector<4x8xf32>
    %239 = vector.shape_cast %236 : vector<4x8xf32> to vector<1x1x4x8xf32>
    tpu.vector_store %arg3[%c0_292, %c5_293, %c0_294, %c56_295], %239 {strides = array<i32>} : memref<1x9x4x64xf32, #tpu.memory_space<vmem>>, vector<1x1x4x8xf32>,
    %c0_296 = arith.constant 0 : index
    %c0_297 = arith.constant 0 : index
    %c128_298 = arith.constant 128 : index
    %240 = vector.load %arg2[%c0_296, %c0_297, %c128_298] : memref<1x4x256xf32, #tpu.memory_space<vmem>>, vector<1x4x8xf32>
    %241 = vector.shape_cast %240 : vector<1x4x8xf32> to vector<4x8xf32>
    %c0_299 = arith.constant 0 : index
    %c6 = arith.constant 6 : index
    %c0_300 = arith.constant 0 : index
    %c0_301 = arith.constant 0 : index
    %242 = vector.load %arg3[%c0_299, %c6, %c0_300, %c0_301] : memref<1x9x4x64xf32, #tpu.memory_space<vmem>>, vector<1x1x4x8xf32>
    %243 = vector.shape_cast %242 : vector<1x1x4x8xf32> to vector<4x8xf32>
    %244 = vector.shape_cast %241 : vector<4x8xf32> to vector<1x1x4x8xf32>
    tpu.vector_store %arg3[%c0_299, %c6, %c0_300, %c0_301], %244 {strides = array<i32>} : memref<1x9x4x64xf32, #tpu.memory_space<vmem>>, vector<1x1x4x8xf32>,
    %c0_302 = arith.constant 0 : index
    %c0_303 = arith.constant 0 : index
    %c144_304 = arith.constant 144 : index
    %245 = vector.load %arg2[%c0_302, %c0_303, %c144_304] : memref<1x4x256xf32, #tpu.memory_space<vmem>>, vector<1x4x8xf32>
    %246 = vector.shape_cast %245 : vector<1x4x8xf32> to vector<4x8xf32>
    %c0_305 = arith.constant 0 : index
    %c6_306 = arith.constant 6 : index
    %c0_307 = arith.constant 0 : index
    %c8_308 = arith.constant 8 : index
    %247 = vector.load %arg3[%c0_305, %c6_306, %c0_307, %c8_308] : memref<1x9x4x64xf32, #tpu.memory_space<vmem>>, vector<1x1x4x8xf32>
    %248 = vector.shape_cast %247 : vector<1x1x4x8xf32> to vector<4x8xf32>
    %249 = vector.shape_cast %246 : vector<4x8xf32> to vector<1x1x4x8xf32>
    tpu.vector_store %arg3[%c0_305, %c6_306, %c0_307, %c8_308], %249 {strides = array<i32>} : memref<1x9x4x64xf32, #tpu.memory_space<vmem>>, vector<1x1x4x8xf32>,
    %c0_309 = arith.constant 0 : index
    %c0_310 = arith.constant 0 : index
    %c160_311 = arith.constant 160 : index
    %250 = vector.load %arg2[%c0_309, %c0_310, %c160_311] : memref<1x4x256xf32, #tpu.memory_space<vmem>>, vector<1x4x8xf32>
    %251 = vector.shape_cast %250 : vector<1x4x8xf32> to vector<4x8xf32>
    %c0_312 = arith.constant 0 : index
    %c6_313 = arith.constant 6 : index
    %c0_314 = arith.constant 0 : index
    %c16_315 = arith.constant 16 : index
    %252 = vector.load %arg3[%c0_312, %c6_313, %c0_314, %c16_315] : memref<1x9x4x64xf32, #tpu.memory_space<vmem>>, vector<1x1x4x8xf32>
    %253 = vector.shape_cast %252 : vector<1x1x4x8xf32> to vector<4x8xf32>
    %254 = vector.shape_cast %251 : vector<4x8xf32> to vector<1x1x4x8xf32>
    tpu.vector_store %arg3[%c0_312, %c6_313, %c0_314, %c16_315], %254 {strides = array<i32>} : memref<1x9x4x64xf32, #tpu.memory_space<vmem>>, vector<1x1x4x8xf32>,
    %c0_316 = arith.constant 0 : index
    %c0_317 = arith.constant 0 : index
    %c176_318 = arith.constant 176 : index
    %255 = vector.load %arg2[%c0_316, %c0_317, %c176_318] : memref<1x4x256xf32, #tpu.memory_space<vmem>>, vector<1x4x8xf32>
    %256 = vector.shape_cast %255 : vector<1x4x8xf32> to vector<4x8xf32>
    %c0_319 = arith.constant 0 : index
    %c6_320 = arith.constant 6 : index
    %c0_321 = arith.constant 0 : index
    %c24_322 = arith.constant 24 : index
    %257 = vector.load %arg3[%c0_319, %c6_320, %c0_321, %c24_322] : memref<1x9x4x64xf32, #tpu.memory_space<vmem>>, vector<1x1x4x8xf32>
    %258 = vector.shape_cast %257 : vector<1x1x4x8xf32> to vector<4x8xf32>
    %259 = vector.shape_cast %256 : vector<4x8xf32> to vector<1x1x4x8xf32>
    tpu.vector_store %arg3[%c0_319, %c6_320, %c0_321, %c24_322], %259 {strides = array<i32>} : memref<1x9x4x64xf32, #tpu.memory_space<vmem>>, vector<1x1x4x8xf32>,
    %c0_323 = arith.constant 0 : index
    %c0_324 = arith.constant 0 : index
    %c192 = arith.constant 192 : index
    %260 = vector.load %arg2[%c0_323, %c0_324, %c192] : memref<1x4x256xf32, #tpu.memory_space<vmem>>, vector<1x4x8xf32>
    %261 = vector.shape_cast %260 : vector<1x4x8xf32> to vector<4x8xf32>
    %c0_325 = arith.constant 0 : index
    %c6_326 = arith.constant 6 : index
    %c0_327 = arith.constant 0 : index
    %c32_328 = arith.constant 32 : index
    %262 = vector.load %arg3[%c0_325, %c6_326, %c0_327, %c32_328] : memref<1x9x4x64xf32, #tpu.memory_space<vmem>>, vector<1x1x4x8xf32>
    %263 = vector.shape_cast %262 : vector<1x1x4x8xf32> to vector<4x8xf32>
    %264 = vector.shape_cast %261 : vector<4x8xf32> to vector<1x1x4x8xf32>
    tpu.vector_store %arg3[%c0_325, %c6_326, %c0_327, %c32_328], %264 {strides = array<i32>} : memref<1x9x4x64xf32, #tpu.memory_space<vmem>>, vector<1x1x4x8xf32>,
    %c0_329 = arith.constant 0 : index
    %c0_330 = arith.constant 0 : index
    %c208 = arith.constant 208 : index
    %265 = vector.load %arg2[%c0_329, %c0_330, %c208] : memref<1x4x256xf32, #tpu.memory_space<vmem>>, vector<1x4x8xf32>
    %266 = vector.shape_cast %265 : vector<1x4x8xf32> to vector<4x8xf32>
    %c0_331 = arith.constant 0 : index
    %c6_332 = arith.constant 6 : index
    %c0_333 = arith.constant 0 : index
    %c40_334 = arith.constant 40 : index
    %267 = vector.load %arg3[%c0_331, %c6_332, %c0_333, %c40_334] : memref<1x9x4x64xf32, #tpu.memory_space<vmem>>, vector<1x1x4x8xf32>
    %268 = vector.shape_cast %267 : vector<1x1x4x8xf32> to vector<4x8xf32>
    %269 = vector.shape_cast %266 : vector<4x8xf32> to vector<1x1x4x8xf32>
    tpu.vector_store %arg3[%c0_331, %c6_332, %c0_333, %c40_334], %269 {strides = array<i32>} : memref<1x9x4x64xf32, #tpu.memory_space<vmem>>, vector<1x1x4x8xf32>,
    %c0_335 = arith.constant 0 : index
    %c0_336 = arith.constant 0 : index
    %c224 = arith.constant 224 : index
    %270 = vector.load %arg2[%c0_335, %c0_336, %c224] : memref<1x4x256xf32, #tpu.memory_space<vmem>>, vector<1x4x8xf32>
    %271 = vector.shape_cast %270 : vector<1x4x8xf32> to vector<4x8xf32>
    %c0_337 = arith.constant 0 : index
    %c6_338 = arith.constant 6 : index
    %c0_339 = arith.constant 0 : index
    %c48_340 = arith.constant 48 : index
    %272 = vector.load %arg3[%c0_337, %c6_338, %c0_339, %c48_340] : memref<1x9x4x64xf32, #tpu.memory_space<vmem>>, vector<1x1x4x8xf32>
    %273 = vector.shape_cast %272 : vector<1x1x4x8xf32> to vector<4x8xf32>
    %274 = vector.shape_cast %271 : vector<4x8xf32> to vector<1x1x4x8xf32>
    tpu.vector_store %arg3[%c0_337, %c6_338, %c0_339, %c48_340], %274 {strides = array<i32>} : memref<1x9x4x64xf32, #tpu.memory_space<vmem>>, vector<1x1x4x8xf32>,
    %c0_341 = arith.constant 0 : index
    %c0_342 = arith.constant 0 : index
    %c240 = arith.constant 240 : index
    %275 = vector.load %arg2[%c0_341, %c0_342, %c240] : memref<1x4x256xf32, #tpu.memory_space<vmem>>, vector<1x4x8xf32>
    %276 = vector.shape_cast %275 : vector<1x4x8xf32> to vector<4x8xf32>
    %c0_343 = arith.constant 0 : index
    %c6_344 = arith.constant 6 : index
    %c0_345 = arith.constant 0 : index
    %c56_346 = arith.constant 56 : index
    %277 = vector.load %arg3[%c0_343, %c6_344, %c0_345, %c56_346] : memref<1x9x4x64xf32, #tpu.memory_space<vmem>>, vector<1x1x4x8xf32>
    %278 = vector.shape_cast %277 : vector<1x1x4x8xf32> to vector<4x8xf32>
    %279 = vector.shape_cast %276 : vector<4x8xf32> to vector<1x1x4x8xf32>
    tpu.vector_store %arg3[%c0_343, %c6_344, %c0_345, %c56_346], %279 {strides = array<i32>} : memref<1x9x4x64xf32, #tpu.memory_space<vmem>>, vector<1x1x4x8xf32>,
    %c0_347 = arith.constant 0 : index
    %c0_348 = arith.constant 0 : index
    %c132_349 = arith.constant 132 : index
    %280 = vector.load %arg2[%c0_347, %c0_348, %c132_349] : memref<1x4x256xf32, #tpu.memory_space<vmem>>, vector<1x4x8xf32>
    %281 = vector.shape_cast %280 : vector<1x4x8xf32> to vector<4x8xf32>
    %c0_350 = arith.constant 0 : index
    %c7 = arith.constant 7 : index
    %c0_351 = arith.constant 0 : index
    %c0_352 = arith.constant 0 : index
    %282 = vector.load %arg3[%c0_350, %c7, %c0_351, %c0_352] : memref<1x9x4x64xf32, #tpu.memory_space<vmem>>, vector<1x1x4x8xf32>
    %283 = vector.shape_cast %282 : vector<1x1x4x8xf32> to vector<4x8xf32>
    %284 = vector.shape_cast %281 : vector<4x8xf32> to vector<1x1x4x8xf32>
    tpu.vector_store %arg3[%c0_350, %c7, %c0_351, %c0_352], %284 {strides = array<i32>} : memref<1x9x4x64xf32, #tpu.memory_space<vmem>>, vector<1x1x4x8xf32>,
    %c0_353 = arith.constant 0 : index
    %c0_354 = arith.constant 0 : index
    %c148_355 = arith.constant 148 : index
    %285 = vector.load %arg2[%c0_353, %c0_354, %c148_355] : memref<1x4x256xf32, #tpu.memory_space<vmem>>, vector<1x4x8xf32>
    %286 = vector.shape_cast %285 : vector<1x4x8xf32> to vector<4x8xf32>
    %c0_356 = arith.constant 0 : index
    %c7_357 = arith.constant 7 : index
    %c0_358 = arith.constant 0 : index
    %c8_359 = arith.constant 8 : index
    %287 = vector.load %arg3[%c0_356, %c7_357, %c0_358, %c8_359] : memref<1x9x4x64xf32, #tpu.memory_space<vmem>>, vector<1x1x4x8xf32>
    %288 = vector.shape_cast %287 : vector<1x1x4x8xf32> to vector<4x8xf32>
    %289 = vector.shape_cast %286 : vector<4x8xf32> to vector<1x1x4x8xf32>
    tpu.vector_store %arg3[%c0_356, %c7_357, %c0_358, %c8_359], %289 {strides = array<i32>} : memref<1x9x4x64xf32, #tpu.memory_space<vmem>>, vector<1x1x4x8xf32>,
    %c0_360 = arith.constant 0 : index
    %c0_361 = arith.constant 0 : index
    %c164_362 = arith.constant 164 : index
    %290 = vector.load %arg2[%c0_360, %c0_361, %c164_362] : memref<1x4x256xf32, #tpu.memory_space<vmem>>, vector<1x4x8xf32>
    %291 = vector.shape_cast %290 : vector<1x4x8xf32> to vector<4x8xf32>
    %c0_363 = arith.constant 0 : index
    %c7_364 = arith.constant 7 : index
    %c0_365 = arith.constant 0 : index
    %c16_366 = arith.constant 16 : index
    %292 = vector.load %arg3[%c0_363, %c7_364, %c0_365, %c16_366] : memref<1x9x4x64xf32, #tpu.memory_space<vmem>>, vector<1x1x4x8xf32>
    %293 = vector.shape_cast %292 : vector<1x1x4x8xf32> to vector<4x8xf32>
    %294 = vector.shape_cast %291 : vector<4x8xf32> to vector<1x1x4x8xf32>
    tpu.vector_store %arg3[%c0_363, %c7_364, %c0_365, %c16_366], %294 {strides = array<i32>} : memref<1x9x4x64xf32, #tpu.memory_space<vmem>>, vector<1x1x4x8xf32>,
    %c0_367 = arith.constant 0 : index
    %c0_368 = arith.constant 0 : index
    %c180_369 = arith.constant 180 : index
    %295 = vector.load %arg2[%c0_367, %c0_368, %c180_369] : memref<1x4x256xf32, #tpu.memory_space<vmem>>, vector<1x4x8xf32>
    %296 = vector.shape_cast %295 : vector<1x4x8xf32> to vector<4x8xf32>
    %c0_370 = arith.constant 0 : index
    %c7_371 = arith.constant 7 : index
    %c0_372 = arith.constant 0 : index
    %c24_373 = arith.constant 24 : index
    %297 = vector.load %arg3[%c0_370, %c7_371, %c0_372, %c24_373] : memref<1x9x4x64xf32, #tpu.memory_space<vmem>>, vector<1x1x4x8xf32>
    %298 = vector.shape_cast %297 : vector<1x1x4x8xf32> to vector<4x8xf32>
    %299 = vector.shape_cast %296 : vector<4x8xf32> to vector<1x1x4x8xf32>
    tpu.vector_store %arg3[%c0_370, %c7_371, %c0_372, %c24_373], %299 {strides = array<i32>} : memref<1x9x4x64xf32, #tpu.memory_space<vmem>>, vector<1x1x4x8xf32>,
    %c0_374 = arith.constant 0 : index
    %c0_375 = arith.constant 0 : index
    %c196 = arith.constant 196 : index
    %300 = vector.load %arg2[%c0_374, %c0_375, %c196] : memref<1x4x256xf32, #tpu.memory_space<vmem>>, vector<1x4x8xf32>
    %301 = vector.shape_cast %300 : vector<1x4x8xf32> to vector<4x8xf32>
    %c0_376 = arith.constant 0 : index
    %c7_377 = arith.constant 7 : index
    %c0_378 = arith.constant 0 : index
    %c32_379 = arith.constant 32 : index
    %302 = vector.load %arg3[%c0_376, %c7_377, %c0_378, %c32_379] : memref<1x9x4x64xf32, #tpu.memory_space<vmem>>, vector<1x1x4x8xf32>
    %303 = vector.shape_cast %302 : vector<1x1x4x8xf32> to vector<4x8xf32>
    %304 = vector.shape_cast %301 : vector<4x8xf32> to vector<1x1x4x8xf32>
    tpu.vector_store %arg3[%c0_376, %c7_377, %c0_378, %c32_379], %304 {strides = array<i32>} : memref<1x9x4x64xf32, #tpu.memory_space<vmem>>, vector<1x1x4x8xf32>,
    %c0_380 = arith.constant 0 : index
    %c0_381 = arith.constant 0 : index
    %c212 = arith.constant 212 : index
    %305 = vector.load %arg2[%c0_380, %c0_381, %c212] : memref<1x4x256xf32, #tpu.memory_space<vmem>>, vector<1x4x8xf32>
    %306 = vector.shape_cast %305 : vector<1x4x8xf32> to vector<4x8xf32>
    %c0_382 = arith.constant 0 : index
    %c7_383 = arith.constant 7 : index
    %c0_384 = arith.constant 0 : index
    %c40_385 = arith.constant 40 : index
    %307 = vector.load %arg3[%c0_382, %c7_383, %c0_384, %c40_385] : memref<1x9x4x64xf32, #tpu.memory_space<vmem>>, vector<1x1x4x8xf32>
    %308 = vector.shape_cast %307 : vector<1x1x4x8xf32> to vector<4x8xf32>
    %309 = vector.shape_cast %306 : vector<4x8xf32> to vector<1x1x4x8xf32>
    tpu.vector_store %arg3[%c0_382, %c7_383, %c0_384, %c40_385], %309 {strides = array<i32>} : memref<1x9x4x64xf32, #tpu.memory_space<vmem>>, vector<1x1x4x8xf32>,
    %c0_386 = arith.constant 0 : index
    %c0_387 = arith.constant 0 : index
    %c228 = arith.constant 228 : index
    %310 = vector.load %arg2[%c0_386, %c0_387, %c228] : memref<1x4x256xf32, #tpu.memory_space<vmem>>, vector<1x4x8xf32>
    %311 = vector.shape_cast %310 : vector<1x4x8xf32> to vector<4x8xf32>
    %c0_388 = arith.constant 0 : index
    %c7_389 = arith.constant 7 : index
    %c0_390 = arith.constant 0 : index
    %c48_391 = arith.constant 48 : index
    %312 = vector.load %arg3[%c0_388, %c7_389, %c0_390, %c48_391] : memref<1x9x4x64xf32, #tpu.memory_space<vmem>>, vector<1x1x4x8xf32>
    %313 = vector.shape_cast %312 : vector<1x1x4x8xf32> to vector<4x8xf32>
    %314 = vector.shape_cast %311 : vector<4x8xf32> to vector<1x1x4x8xf32>
    tpu.vector_store %arg3[%c0_388, %c7_389, %c0_390, %c48_391], %314 {strides = array<i32>} : memref<1x9x4x64xf32, #tpu.memory_space<vmem>>, vector<1x1x4x8xf32>,
    %c0_392 = arith.constant 0 : index
    %c0_393 = arith.constant 0 : index
    %c244 = arith.constant 244 : index
    %315 = vector.load %arg2[%c0_392, %c0_393, %c244] : memref<1x4x256xf32, #tpu.memory_space<vmem>>, vector<1x4x8xf32>
    %316 = vector.shape_cast %315 : vector<1x4x8xf32> to vector<4x8xf32>
    %c0_394 = arith.constant 0 : index
    %c7_395 = arith.constant 7 : index
    %c0_396 = arith.constant 0 : index
    %c56_397 = arith.constant 56 : index
    %317 = vector.load %arg3[%c0_394, %c7_395, %c0_396, %c56_397] : memref<1x9x4x64xf32, #tpu.memory_space<vmem>>, vector<1x1x4x8xf32>
    %318 = vector.shape_cast %317 : vector<1x1x4x8xf32> to vector<4x8xf32>
    %319 = vector.shape_cast %316 : vector<4x8xf32> to vector<1x1x4x8xf32>
    tpu.vector_store %arg3[%c0_394, %c7_395, %c0_396, %c56_397], %319 {strides = array<i32>} : memref<1x9x4x64xf32, #tpu.memory_space<vmem>>, vector<1x1x4x8xf32>,
    %c0_398 = arith.constant 0 : index
    %c0_399 = arith.constant 0 : index
    %c136_400 = arith.constant 136 : index
    %320 = vector.load %arg2[%c0_398, %c0_399, %c136_400] : memref<1x4x256xf32, #tpu.memory_space<vmem>>, vector<1x4x8xf32>
    %321 = vector.shape_cast %320 : vector<1x4x8xf32> to vector<4x8xf32>
    %c0_401 = arith.constant 0 : index
    %c8_402 = arith.constant 8 : index
    %c0_403 = arith.constant 0 : index
    %c0_404 = arith.constant 0 : index
    %322 = vector.load %arg3[%c0_401, %c8_402, %c0_403, %c0_404] : memref<1x9x4x64xf32, #tpu.memory_space<vmem>>, vector<1x1x4x8xf32>
    %323 = vector.shape_cast %322 : vector<1x1x4x8xf32> to vector<4x8xf32>
    %324 = vector.shape_cast %321 : vector<4x8xf32> to vector<1x1x4x8xf32>
    tpu.vector_store %arg3[%c0_401, %c8_402, %c0_403, %c0_404], %324 {strides = array<i32>} : memref<1x9x4x64xf32, #tpu.memory_space<vmem>>, vector<1x1x4x8xf32>,
    %c0_405 = arith.constant 0 : index
    %c0_406 = arith.constant 0 : index
    %c152_407 = arith.constant 152 : index
    %325 = vector.load %arg2[%c0_405, %c0_406, %c152_407] : memref<1x4x256xf32, #tpu.memory_space<vmem>>, vector<1x4x8xf32>
    %326 = vector.shape_cast %325 : vector<1x4x8xf32> to vector<4x8xf32>
    %c0_408 = arith.constant 0 : index
    %c8_409 = arith.constant 8 : index
    %c0_410 = arith.constant 0 : index
    %c8_411 = arith.constant 8 : index
    %327 = vector.load %arg3[%c0_408, %c8_409, %c0_410, %c8_411] : memref<1x9x4x64xf32, #tpu.memory_space<vmem>>, vector<1x1x4x8xf32>
    %328 = vector.shape_cast %327 : vector<1x1x4x8xf32> to vector<4x8xf32>
    %329 = vector.shape_cast %326 : vector<4x8xf32> to vector<1x1x4x8xf32>
    tpu.vector_store %arg3[%c0_408, %c8_409, %c0_410, %c8_411], %329 {strides = array<i32>} : memref<1x9x4x64xf32, #tpu.memory_space<vmem>>, vector<1x1x4x8xf32>,
    %c0_412 = arith.constant 0 : index
    %c0_413 = arith.constant 0 : index
    %c168_414 = arith.constant 168 : index
    %330 = vector.load %arg2[%c0_412, %c0_413, %c168_414] : memref<1x4x256xf32, #tpu.memory_space<vmem>>, vector<1x4x8xf32>
    %331 = vector.shape_cast %330 : vector<1x4x8xf32> to vector<4x8xf32>
    %c0_415 = arith.constant 0 : index
    %c8_416 = arith.constant 8 : index
    %c0_417 = arith.constant 0 : index
    %c16_418 = arith.constant 16 : index
    %332 = vector.load %arg3[%c0_415, %c8_416, %c0_417, %c16_418] : memref<1x9x4x64xf32, #tpu.memory_space<vmem>>, vector<1x1x4x8xf32>
    %333 = vector.shape_cast %332 : vector<1x1x4x8xf32> to vector<4x8xf32>
    %334 = vector.shape_cast %331 : vector<4x8xf32> to vector<1x1x4x8xf32>
    tpu.vector_store %arg3[%c0_415, %c8_416, %c0_417, %c16_418], %334 {strides = array<i32>} : memref<1x9x4x64xf32, #tpu.memory_space<vmem>>, vector<1x1x4x8xf32>,
    %c0_419 = arith.constant 0 : index
    %c0_420 = arith.constant 0 : index
    %c184_421 = arith.constant 184 : index
    %335 = vector.load %arg2[%c0_419, %c0_420, %c184_421] : memref<1x4x256xf32, #tpu.memory_space<vmem>>, vector<1x4x8xf32>
    %336 = vector.shape_cast %335 : vector<1x4x8xf32> to vector<4x8xf32>
    %c0_422 = arith.constant 0 : index
    %c8_423 = arith.constant 8 : index
    %c0_424 = arith.constant 0 : index
    %c24_425 = arith.constant 24 : index
    %337 = vector.load %arg3[%c0_422, %c8_423, %c0_424, %c24_425] : memref<1x9x4x64xf32, #tpu.memory_space<vmem>>, vector<1x1x4x8xf32>
    %338 = vector.shape_cast %337 : vector<1x1x4x8xf32> to vector<4x8xf32>
    %339 = vector.shape_cast %336 : vector<4x8xf32> to vector<1x1x4x8xf32>
    tpu.vector_store %arg3[%c0_422, %c8_423, %c0_424, %c24_425], %339 {strides = array<i32>} : memref<1x9x4x64xf32, #tpu.memory_space<vmem>>, vector<1x1x4x8xf32>,
    %c0_426 = arith.constant 0 : index
    %c0_427 = arith.constant 0 : index
    %c200 = arith.constant 200 : index
    %340 = vector.load %arg2[%c0_426, %c0_427, %c200] : memref<1x4x256xf32, #tpu.memory_space<vmem>>, vector<1x4x8xf32>
    %341 = vector.shape_cast %340 : vector<1x4x8xf32> to vector<4x8xf32>
    %c0_428 = arith.constant 0 : index
    %c8_429 = arith.constant 8 : index
    %c0_430 = arith.constant 0 : index
    %c32_431 = arith.constant 32 : index
    %342 = vector.load %arg3[%c0_428, %c8_429, %c0_430, %c32_431] : memref<1x9x4x64xf32, #tpu.memory_space<vmem>>, vector<1x1x4x8xf32>
    %343 = vector.shape_cast %342 : vector<1x1x4x8xf32> to vector<4x8xf32>
    %344 = vector.shape_cast %341 : vector<4x8xf32> to vector<1x1x4x8xf32>
    tpu.vector_store %arg3[%c0_428, %c8_429, %c0_430, %c32_431], %344 {strides = array<i32>} : memref<1x9x4x64xf32, #tpu.memory_space<vmem>>, vector<1x1x4x8xf32>,
    %c0_432 = arith.constant 0 : index
    %c0_433 = arith.constant 0 : index
    %c216 = arith.constant 216 : index
    %345 = vector.load %arg2[%c0_432, %c0_433, %c216] : memref<1x4x256xf32, #tpu.memory_space<vmem>>, vector<1x4x8xf32>
    %346 = vector.shape_cast %345 : vector<1x4x8xf32> to vector<4x8xf32>
    %c0_434 = arith.constant 0 : index
    %c8_435 = arith.constant 8 : index
    %c0_436 = arith.constant 0 : index
    %c40_437 = arith.constant 40 : index
    %347 = vector.load %arg3[%c0_434, %c8_435, %c0_436, %c40_437] : memref<1x9x4x64xf32, #tpu.memory_space<vmem>>, vector<1x1x4x8xf32>
    %348 = vector.shape_cast %347 : vector<1x1x4x8xf32> to vector<4x8xf32>
    %349 = vector.shape_cast %346 : vector<4x8xf32> to vector<1x1x4x8xf32>
    tpu.vector_store %arg3[%c0_434, %c8_435, %c0_436, %c40_437], %349 {strides = array<i32>} : memref<1x9x4x64xf32, #tpu.memory_space<vmem>>, vector<1x1x4x8xf32>,
    %c0_438 = arith.constant 0 : index
    %c0_439 = arith.constant 0 : index
    %c232 = arith.constant 232 : index
    %350 = vector.load %arg2[%c0_438, %c0_439, %c232] : memref<1x4x256xf32, #tpu.memory_space<vmem>>, vector<1x4x8xf32>
    %351 = vector.shape_cast %350 : vector<1x4x8xf32> to vector<4x8xf32>
    %c0_440 = arith.constant 0 : index
    %c8_441 = arith.constant 8 : index
    %c0_442 = arith.constant 0 : index
    %c48_443 = arith.constant 48 : index
    %352 = vector.load %arg3[%c0_440, %c8_441, %c0_442, %c48_443] : memref<1x9x4x64xf32, #tpu.memory_space<vmem>>, vector<1x1x4x8xf32>
    %353 = vector.shape_cast %352 : vector<1x1x4x8xf32> to vector<4x8xf32>
    %354 = vector.shape_cast %351 : vector<4x8xf32> to vector<1x1x4x8xf32>
    tpu.vector_store %arg3[%c0_440, %c8_441, %c0_442, %c48_443], %354 {strides = array<i32>} : memref<1x9x4x64xf32, #tpu.memory_space<vmem>>, vector<1x1x4x8xf32>,
    %c0_444 = arith.constant 0 : index
    %c0_445 = arith.constant 0 : index
    %c248 = arith.constant 248 : index
    %355 = vector.load %arg2[%c0_444, %c0_445, %c248] : memref<1x4x256xf32, #tpu.memory_space<vmem>>, vector<1x4x8xf32>
    %356 = vector.shape_cast %355 : vector<1x4x8xf32> to vector<4x8xf32>
    %c0_446 = arith.constant 0 : index
    %c8_447 = arith.constant 8 : index
    %c0_448 = arith.constant 0 : index
    %c56_449 = arith.constant 56 : index
    %357 = vector.load %arg3[%c0_446, %c8_447, %c0_448, %c56_449] : memref<1x9x4x64xf32, #tpu.memory_space<vmem>>, vector<1x1x4x8xf32>
    %358 = vector.shape_cast %357 : vector<1x1x4x8xf32> to vector<4x8xf32>
    %359 = vector.shape_cast %356 : vector<4x8xf32> to vector<1x1x4x8xf32>
    tpu.vector_store %arg3[%c0_446, %c8_447, %c0_448, %c56_449], %359 {strides = array<i32>} : memref<1x9x4x64xf32, #tpu.memory_space<vmem>>, vector<1x1x4x8xf32>,
    return
  }
  func.func @transform_0(%arg0: i32, %arg1: i32) -> (i32, i32, i32) {
    %c0_i32 = arith.constant 0 : i32
    %c0_i32_0 = arith.constant 0 : i32
    return %arg0, %arg1, %c0_i32 : i32, i32, i32
  }
  func.func @transform_1(%arg0: i32, %arg1: i32) -> (i32, i32, i32, i32) {
    %c0_i32 = arith.constant 0 : i32
    %c0_i32_0 = arith.constant 0 : i32
    %c0_i32_1 = arith.constant 0 : i32
    return %arg0, %c0_i32, %arg1, %c0_i32_0 : i32, i32, i32, i32
  }
}

</mosaic_0001>

<llo_original>
// kernel: tpu_custom_call.1
$region0: #{tpu_custom_call.1}
  #allocation0 [shape = 'u32[]', space=smem, size = 0x4, offset = 0x4, fixed_abs, tag = 'smem constant byte address 0x4 - core index']
  #allocation1 [shape = 'u32[72,128]{1,0:T(1,128)}', space=vmem, size = 0x9000, scoped, tag = 'internal scratch']
  %s0 = inlined_call_operand.hbm [shape: f32[2,4,256], index: 0, kind: input, shape index: {}]
  %s1 = inlined_call_operand.hbm [shape: f32[2,9,4,64], index: 1, kind: output, shape index: {}]
  %s2 = sld [smem:[#allocation0]]
  $region41: #{tpu_custom_call.1} parent=0
    _
  %s4 = ssub.s32 1, %s2
  %s5 = scalar_select 0, %s4, %s2
  $region1: #{tpu_custom_call.1} parent=0
    #allocation2 [shape = 'u8[8192]{0}', space=vmem, size = 0x2000, scoped, tag = 'input window, operand 0']
    #allocation3 [shape = 's32[2]{0}', space=sflag, size = 0x8, scoped, tag = 'scoped memory for tpu_custom_call.1']
    #allocation4 [shape = 's32[2]{0}', space=sflag, size = 0x8, scoped, tag = 'scoped memory for tpu_custom_call.1']
    #allocation5 [shape = 'u8[36864]{0}', space=vmem, size = 0x9000, scoped, tag = 'output window, operand 0']
    %6 = vsyncpa [#allocation3], 0
    %s7 = scalar_lea.sflag [#allocation3], 1
    %8 = vsyncpa %s7, 0
    %9 = vsyncpa [#allocation4], 0
    %s10 = scalar_lea.sflag [#allocation4], 1
    %11 = vsyncpa %s10, 0
    loop: start=0, step=1, limit=4
    $region2: #{tpu_custom_call.1} parent=1 // loop_pre_header
      _
    $region3: #{tpu_custom_call.1} parent=1 // loop_header
      %s13 = sphi 0, %s17
      %p14 = scmp.ge.s32.totalorder %s13, 4
      %s20 = sphi 0, %s32
      %s21 = sphi 0, %s28
      %s22 = sphi 0, %s20
      %s23 = sphi 0, %s21
      %s24 = sphi 0, %s22
      %s25 = sphi 0, %s23
      %s37 = sphi 0, %s39
      %s40 = sphi 0, %s37
      %s41 = sphi 0, %s40
      %s57 = sphi 0, %s41
      %s65 = sphi 0, %s67
      %s68 = sphi 0, %s65
      %s69 = sphi 0, %s68
      %s85 = sphi 0, %s69
    $region4: #{tpu_custom_call.1} parent=1 // loop_header_branch
      %16 = sbr.rel (%p14) target = $region8
    $region5: #{tpu_custom_call.1} parent=1 // loop_body
      %s18 = ssub.s32 %s13, 1
      %s19 = ssub.s32 %s13, 2
      %s26 = sadd.s32 1, %s21
      %p27 = scmp.ge.s32.totalorder %s26, 1
      %s28 = scalar_select %p27, 0, %s26
      %s29 = sadd.s32 1, %s20
      %s30 = scalar_select %p27, %s29, %s20
      %p31 = scmp.ge.s32.totalorder %s30, 2
      %s32 = scalar_select %p31, 0, %s30
      %s33 = ssub.s32 %s20, %s32
      %s34 = ssub.s32 %s21, %s28
      %s35 = sor.u32 %s33, %s34
      %p36 = scmp.eq.s32.totalorder %s35, 0
      %s38 = sadd.s32 %s37, 1
      %s39 = scalar_select %p36, %s37, %s38
      %p42 = pneg %p36
      %p43 = scmp.eq.s32.totalorder %s13, 1
      %p44 = por %p42, %p43
      %p45 = scmp.ne.s32.totalorder %s37, %s40
      %p46 = scmp.eq.s32.totalorder %s13, 0
      %p47 = por %p45, %p46
      %p48 = scmp.ne.s32.totalorder %s37, %s40
      %p49 = scmp.eq.s32.totalorder %s18, 1
      %p50 = por %p48, %p49
      %p51 = scmp.ne.s32.totalorder %s40, %s41
      %p52 = scmp.eq.s32.totalorder %s18, 0
      %p53 = por %p51, %p52
      %p54 = scmp.ne.s32.totalorder %s40, %s41
      %p55 = scmp.eq.s32.totalorder %s19, 1
      %p56 = por %p54, %p55
      %p58 = scmp.ne.s32.totalorder %s41, %s57
      %p59 = scmp.eq.s32.totalorder %s19, 0
      %p60 = por %p58, %p59
      %s61 = ssub.s32 %s20, %s32
      %s62 = ssub.s32 %s21, %s28
      %s63 = sor.u32 %s61, %s62
      %p64 = scmp.eq.s32.totalorder %s63, 0
      %s66 = sadd.s32 %s65, 1
      %s67 = scalar_select %p64, %s65, %s66
      %p70 = pneg %p64
      %p71 = scmp.eq.s32.totalorder %s13, 1
      %p72 = por %p70, %p71
      %p73 = scmp.ne.s32.totalorder %s65, %s68
      %p74 = scmp.eq.s32.totalorder %s13, 0
      %p75 = por %p73, %p74
      %p76 = scmp.ne.s32.totalorder %s65, %s68
      %p77 = scmp.eq.s32.totalorder %s18, 1
      %p78 = por %p76, %p77
      %p79 = scmp.ne.s32.totalorder %s68, %s69
      %p80 = scmp.eq.s32.totalorder %s18, 0
      %p81 = por %p79, %p80
      %p82 = scmp.ne.s32.totalorder %s68, %s69
      %p83 = scmp.eq.s32.totalorder %s19, 1
      %p84 = por %p82, %p83
      %p86 = scmp.ne.s32.totalorder %s69, %s85
      %p87 = scmp.eq.s32.totalorder %s19, 0
      %p88 = por %p86, %p87
      %p89 = scmp.le.s32.totalorder 1, %s13
      %p90 = scmp.lt.s32.totalorder %s13, 3
      %p91 = pnand %p89, %p90
      %p92 = pneg %p91
      // Predicated region
      $region9: #{tpu_custom_call.1} parent=5 // pred_check
        _
      $region10: #{tpu_custom_call.1} parent=5 // pred_check_branch
        %94 = sbr.rel (%p91) target = $region12
      $region11: #{tpu_custom_call.1} parent=5 // pred_region
        %s95 = ssub.s32 %s13, 1
      $region12: #{tpu_custom_call.1} parent=5 // pred_fallthru
        _
      %p96 = scmp.lt.s32.totalorder %s13, 2
      // Predicated region
      $region13: #{tpu_custom_call.1} parent=5 // pred_check
        %p97 = pneg %p96
      $region14: #{tpu_custom_call.1} parent=5 // pred_check_branch
        %99 = sbr.rel (%p97) target = $region16
      $region15: #{tpu_custom_call.1} parent=5 // pred_region
        // Predicated region
        $region17: #{tpu_custom_call.1} parent=15 // pred_check
          %p100 = pneg %p47
        $region18: #{tpu_custom_call.1} parent=15 // pred_check_branch
          %102 = sbr.rel (%p100) target = $region20
        $region19: #{tpu_custom_call.1} parent=15 // pred_region
          %s103 = sand.u32 %s37, 1
          %s104 = scalar_lea.sflag [#allocation3], %s103
          %s105 = sand.u32 %s37, 1
          %s106 = smul.addr %s105, 8
          %s107 = scalar_lea.vmem [#allocation2], %s106
          %109 = vsyncadd %s104, 0
          %s110 = smul.addr %s21, 2
          %s111 = smul.addr %s20, 2
          %s112 = sadd.s32 %s110, %s111
          %s113 = smul.addr %s112, 4
          %s114 = scalar_lea.hbm %s0, %s113
          %s116 = sshll.u32 %s114, 4
          %s117 = int_to_ptr.hbm [resolvable:$true] %s116
          %s118 = sshll.u32 %s107, 4
          %s119 = int_to_ptr.vmem [resolvable:$true] %s118
          %121 = dma.hbm_to_vmem [thread:$0]  %s117, 128, %s119, %s104
        $region20: #{tpu_custom_call.1} parent=15 // pred_fallthru
          _
      $region16: #{tpu_custom_call.1} parent=5 // pred_fallthru
        _
      %p122 = scmp.le.s32.totalorder 1, %s13
      %p123 = scmp.lt.s32.totalorder %s13, 3
      %p124 = pnand %p122, %p123
      %p125 = pneg %p124
      // Predicated region
      $region21: #{tpu_custom_call.1} parent=5 // pred_check
        _
      $region22: #{tpu_custom_call.1} parent=5 // pred_check_branch
        %127 = sbr.rel (%p124) target = $region24
      $region23: #{tpu_custom_call.1} parent=5 // pred_region
        %s128 = ssub.s32 %s13, 1
        %s129 = sand.u32 %s40, 1
        %s130 = scalar_lea.sflag [#allocation3], %s129
        %s131 = sand.u32 %s40, 1
        %s132 = smul.addr %s131, 8
        %s133 = scalar_lea.vmem [#allocation2], %s132
        // Predicated region
        $region25: #{tpu_custom_call.1} parent=23 // pred_check
          %p134 = pneg %p53
        $region26: #{tpu_custom_call.1} parent=23 // pred_check_branch
          %136 = sbr.rel (%p134) target = $region28
        $region27: #{tpu_custom_call.1} parent=23 // pred_region
          %138 = dma.done %s130, 128
        $region28: #{tpu_custom_call.1} parent=23 // pred_fallthru
          _
        %s139 = sand.u32 %s40, 1
        %s140 = scalar_lea.sflag [#allocation3], %s139
        %s141 = sand.u32 %s40, 1
        %s142 = smul.addr %s141, 8
        %s143 = scalar_lea.vmem [#allocation2], %s142
        %p144 = pneg %p53
        %p145 = pneg %p50
        %p146 = pneg %p81
        %p147 = pneg %p78
        %s148 = sand.u32 %s68, 1
        %s149 = scalar_lea.sflag [#allocation4], %s148
        %s150 = sand.u32 %s68, 1
        %s151 = smul.addr %s150, 36
        %s152 = scalar_lea.vmem [#allocation5], %s151
        %v153 = vld [vmem:[%s133] sm:$0xf]
        %vm154 = vcmask 60416
        %155 = vst.msk [vmem:[%s152] sm:$0xf] %vm154, %v153
        %v156 = vld [vmem:[%s133] sm:$0xf]
        %158 = vst [vmem:[#allocation1] ss:$2 sm:$0xff] %v156
        %v159 = vld.sshfl [vmem:[#allocation1] sm:$0xff pattern:$0x75316420]
        %160 = vrot.lane.b32.xlu0 %v159, 120
        %v161 = vpop.permute.xlu0 %160
        %vm163 = vcmask 126016
        %164 = vst.msk [vmem:[%s152] sm:$0xf] %vm163, %v161
        %v165 = vld [vmem:[%s133] sm:$0xf]
        %167 = vst [vmem:[#allocation1] ss:$2 sm:$0xff] %v165
        %v168 = vld.sshfl [vmem:[#allocation1] sm:$0xff pattern:$0x75316420]
        %169 = vrot.lane.b32.xlu0 %v168, 112
        %v170 = vpop.permute.xlu0 %169
        %vm172 = vcmask 191616
        %173 = vst.msk [vmem:[%s152] sm:$0xf] %vm172, %v170
        %v174 = vld [vmem:[%s133] sm:$0xf]
        %176 = vst [vmem:[#allocation1] ss:$2 sm:$0xff] %v174
        %v177 = vld.sshfl [vmem:[#allocation1] sm:$0xff pattern:$0x75316420]
        %178 = vrot.lane.b32.xlu0 %v177, 104
        %v179 = vpop.permute.xlu0 %178
        %vm181 = vcmask 257216
        %182 = vst.msk [vmem:[%s152] sm:$0xf] %vm181, %v179
        %v183 = vld [vmem:[%s133] sm:$0xf]
        %185 = vst [vmem:[#allocation1] ss:$2 sm:$0xff] %v183
        %v186 = vld.sshfl [vmem:[#allocation1] sm:$0xff pattern:$0x75316420]
        %187 = vrot.lane.b32.xlu0 %v186, 96
        %v188 = vpop.permute.xlu0 %187
        %vm190 = vcmask 322816
        %191 = vst.msk [vmem:[%s152] sm:$0xf] %vm190, %v188
        %v192 = vld [vmem:[%s133] sm:$0xf]
        %194 = vst [vmem:[#allocation1] ss:$2 sm:$0xff] %v192
        %v195 = vld.sshfl [vmem:[#allocation1] sm:$0xff pattern:$0x75316420]
        %196 = vrot.lane.b32.xlu0 %v195, 88
        %v197 = vpop.permute.xlu0 %196
        %vm199 = vcmask 388416
        %200 = vst.msk [vmem:[%s152] sm:$0xf] %vm199, %v197
        %v201 = vld [vmem:[%s133] sm:$0xf]
        %203 = vst [vmem:[#allocation1] ss:$2 sm:$0xff] %v201
        %v204 = vld.sshfl [vmem:[#allocation1] sm:$0xff pattern:$0x75316420]
        %205 = vrot.lane.b32.xlu0 %v204, 80
        %v206 = vpop.permute.xlu0 %205
        %vm208 = vcmask 454016
        %209 = vst.msk [vmem:[%s152] sm:$0xf] %vm208, %v206
        %v210 = vld [vmem:[%s133] sm:$0xf]
        %212 = vst [vmem:[#allocation1] ss:$2 sm:$0xff] %v210
        %v213 = vld.sshfl [vmem:[#allocation1] sm:$0xff pattern:$0x75316420]
        %214 = vrot.lane.b32.xlu0 %v213, 72
        %v215 = vpop.permute.xlu0 %214
        %vm217 = vcmask 519616
        %218 = vst.msk [vmem:[%s152] sm:$0xf] %vm217, %v215
        %v219 = vld [vmem:[%s133] sm:$0xf]
        %221 = vst [vmem:[#allocation1] ss:$2 sm:$0xff] %v219
        %v222 = vld.sshfl [vmem:[#allocation1] sm:$0xff pattern:$0x75316420]
        %223 = vrot.lane.b32.xlu0 %v222, 124
        %v224 = vpop.permute.xlu0 %223
        %s226 = scalar_lea.vmem %s152, 4 [#allocation5]
        %227 = vst.msk [vmem:[%s226] sm:$0xf] %vm154, %v224
        %v228 = vld [vmem:[%s133] sm:$0xf]
        %230 = vst [vmem:[#allocation1] ss:$2 sm:$0xff] %v228
        %v231 = vld.sshfl [vmem:[#allocation1] sm:$0xff pattern:$0x75316420]
        %232 = vrot.lane.b32.xlu0 %v231, 116
        %v233 = vpop.permute.xlu0 %232
        %235 = vst.msk [vmem:[%s226] sm:$0xf] %vm163, %v233
        %v236 = vld [vmem:[%s133] sm:$0xf]
        %238 = vst [vmem:[#allocation1] ss:$2 sm:$0xff] %v236
        %v239 = vld.sshfl [vmem:[#allocation1] sm:$0xff pattern:$0x75316420]
        %240 = vrot.lane.b32.xlu0 %v239, 108
        %v241 = vpop.permute.xlu0 %240
        %243 = vst.msk [vmem:[%s226] sm:$0xf] %vm172, %v241
        %v244 = vld [vmem:[%s133] sm:$0xf]
        %246 = vst [vmem:[#allocation1] ss:$2 sm:$0xff] %v244
        %v247 = vld.sshfl [vmem:[#allocation1] sm:$0xff pattern:$0x75316420]
        %248 = vrot.lane.b32.xlu0 %v247, 100
        %v249 = vpop.permute.xlu0 %248
        %251 = vst.msk [vmem:[%s226] sm:$0xf] %vm181, %v249
        %v252 = vld [vmem:[%s133] sm:$0xf]
        %254 = vst [vmem:[#allocation1] ss:$2 sm:$0xff] %v252
        %v255 = vld.sshfl [vmem:[#allocation1] sm:$0xff pattern:$0x75316420]
        %256 = vrot.lane.b32.xlu0 %v255, 92
        %v257 = vpop.permute.xlu0 %256
        %259 = vst.msk [vmem:[%s226] sm:$0xf] %vm190, %v257
        %v260 = vld [vmem:[%s133] sm:$0xf]
        %262 = vst [vmem:[#allocation1] ss:$2 sm:$0xff] %v260
        %v263 = vld.sshfl [vmem:[#allocation1] sm:$0xff pattern:$0x75316420]
        %264 = vrot.lane.b32.xlu0 %v263, 84
        %v265 = vpop.permute.xlu0 %264
        %267 = vst.msk [vmem:[%s226] sm:$0xf] %vm199, %v265
        %v268 = vld [vmem:[%s133] sm:$0xf]
        %270 = vst [vmem:[#allocation1] ss:$2 sm:$0xff] %v268
        %v271 = vld.sshfl [vmem:[#allocation1] sm:$0xff pattern:$0x75316420]
        %272 = vrot.lane.b32.xlu0 %v271, 76
        %v273 = vpop.permute.xlu0 %272
        %275 = vst.msk [vmem:[%s226] sm:$0xf] %vm208, %v273
        %v276 = vld [vmem:[%s133] sm:$0xf]
        %278 = vst [vmem:[#allocation1] ss:$2 sm:$0xff] %v276
        %v279 = vld.sshfl [vmem:[#allocation1] sm:$0xff pattern:$0x75316420]
        %280 = vrot.lane.b32.xlu0 %v279, 68
        %v281 = vpop.permute.xlu0 %280
        %283 = vst.msk [vmem:[%s226] sm:$0xf] %vm217, %v281
        %v284 = vld [vmem:[%s133] sm:$0xf]
        %286 = vst [vmem:[#allocation1] ss:$2 sm:$0xff] %v284
        %v287 = vld.sshfl [vmem:[#allocation1] sm:$0xff pattern:$0x75316420]
        %288 = vrot.lane.b32.xlu0 %v287, 120
        %v289 = vpop.permute.xlu0 %288
        %s291 = scalar_lea.vmem %s152, 8 [#allocation5]
        %292 = vst.msk [vmem:[%s291] sm:$0xf] %vm154, %v289
        %v293 = vld [vmem:[%s133] sm:$0xf]
        %295 = vst [vmem:[#allocation1] ss:$2 sm:$0xff] %v293
        %v296 = vld.sshfl [vmem:[#allocation1] sm:$0xff pattern:$0x75316420]
        %297 = vrot.lane.b32.xlu0 %v296, 112
        %v298 = vpop.permute.xlu0 %297
        %300 = vst.msk [vmem:[%s291] sm:$0xf] %vm163, %v298
        %v301 = vld [vmem:[%s133] sm:$0xf]
        %303 = vst [vmem:[#allocation1] ss:$2 sm:$0xff] %v301
        %v304 = vld.sshfl [vmem:[#allocation1] sm:$0xff pattern:$0x75316420]
        %305 = vrot.lane.b32.xlu0 %v304, 104
        %v306 = vpop.permute.xlu0 %305
        %308 = vst.msk [vmem:[%s291] sm:$0xf] %vm172, %v306
        %v309 = vld [vmem:[%s133] sm:$0xf]
        %311 = vst [vmem:[#allocation1] ss:$2 sm:$0xff] %v309
        %v312 = vld.sshfl [vmem:[#allocation1] sm:$0xff pattern:$0x75316420]
        %313 = vrot.lane.b32.xlu0 %v312, 96
        %v314 = vpop.permute.xlu0 %313
        %316 = vst.msk [vmem:[%s291] sm:$0xf] %vm181, %v314
        %v317 = vld [vmem:[%s133] sm:$0xf]
        %319 = vst [vmem:[#allocation1] ss:$2 sm:$0xff] %v317
        %v320 = vld.sshfl [vmem:[#allocation1] sm:$0xff pattern:$0x75316420]
        %321 = vrot.lane.b32.xlu0 %v320, 88
        %v322 = vpop.permute.xlu0 %321
        %324 = vst.msk [vmem:[%s291] sm:$0xf] %vm190, %v322
        %v325 = vld [vmem:[%s133] sm:$0xf]
        %327 = vst [vmem:[#allocation1] ss:$2 sm:$0xff] %v325
        %v328 = vld.sshfl [vmem:[#allocation1] sm:$0xff pattern:$0x75316420]
        %329 = vrot.lane.b32.xlu0 %v328, 80
        %v330 = vpop.permute.xlu0 %329
        %332 = vst.msk [vmem:[%s291] sm:$0xf] %vm199, %v330
        %v333 = vld [vmem:[%s133] sm:$0xf]
        %335 = vst [vmem:[#allocation1] ss:$2 sm:$0xff] %v333
        %v336 = vld.sshfl [vmem:[#allocation1] sm:$0xff pattern:$0x75316420]
        %337 = vrot.lane.b32.xlu0 %v336, 72
        %v338 = vpop.permute.xlu0 %337
        %340 = vst.msk [vmem:[%s291] sm:$0xf] %vm208, %v338
        %v341 = vld [vmem:[%s133] sm:$0xf]
        %343 = vst [vmem:[#allocation1] ss:$2 sm:$0xff] %v341
        %v344 = vld.sshfl [vmem:[#allocation1] sm:$0xff pattern:$0x75316420]
        %345 = vrot.lane.b32.xlu0 %v344, 64
        %v346 = vpop.permute.xlu0 %345
        %348 = vst.msk [vmem:[%s291] sm:$0xf] %vm217, %v346
        %v349 = vld [vmem:[%s133] sm:$0xf]
        %351 = vst [vmem:[#allocation1] ss:$2 sm:$0xff] %v349
        %v352 = vld.sshfl [vmem:[#allocation1] sm:$0xff pattern:$0x75316420]
        %353 = vrot.lane.b32.xlu0 %v352, 64
        %v354 = vpop.permute.xlu0 %353
        %s356 = scalar_lea.vmem %s152, 12 [#allocation5]
        %357 = vst.msk [vmem:[%s356] sm:$0xf] %vm154, %v354
        %v358 = vld [vmem:[%s133] sm:$0xf]
        %360 = vst [vmem:[#allocation1] ss:$2 sm:$0xff] %v358
        %v361 = vld.sshfl [vmem:[#allocation1] sm:$0xff pattern:$0x75316420]
        %362 = vrot.lane.b32.xlu0 %v361, 56
        %v363 = vpop.permute.xlu0 %362
        %365 = vst.msk [vmem:[%s356] sm:$0xf] %vm163, %v363
        %v366 = vld [vmem:[%s133] sm:$0xf]
        %368 = vst [vmem:[#allocation1] ss:$2 sm:$0xff] %v366
        %v369 = vld.sshfl [vmem:[#allocation1] sm:$0xff pattern:$0x75316420]
        %370 = vrot.lane.b32.xlu0 %v369, 48
        %v371 = vpop.permute.xlu0 %370
        %373 = vst.msk [vmem:[%s356] sm:$0xf] %vm172, %v371
        %v374 = vld [vmem:[%s133] sm:$0xf]
        %376 = vst [vmem:[#allocation1] ss:$2 sm:$0xff] %v374
        %v377 = vld.sshfl [vmem:[#allocation1] sm:$0xff pattern:$0x75316420]
        %378 = vrot.lane.b32.xlu0 %v377, 40
        %v379 = vpop.permute.xlu0 %378
        %381 = vst.msk [vmem:[%s356] sm:$0xf] %vm181, %v379
        %v382 = vld [vmem:[%s133 + $0x4] sm:$0xf]
        %384 = vst [vmem:[#allocation1] ss:$2 sm:$0xff] %v382
        %v385 = vld.sshfl [vmem:[#allocation1] sm:$0xff pattern:$0x75316420]
        %386 = vrot.lane.b32.xlu0 %v385, 32
        %v387 = vpop.permute.xlu0 %386
        %389 = vst.msk [vmem:[%s356] sm:$0xf] %vm190, %v387
        %v390 = vld [vmem:[%s133 + $0x4] sm:$0xf]
        %392 = vst [vmem:[#allocation1] ss:$2 sm:$0xff] %v390
        %v393 = vld.sshfl [vmem:[#allocation1] sm:$0xff pattern:$0x75316420]
        %394 = vrot.lane.b32.xlu0 %v393, 24
        %v395 = vpop.permute.xlu0 %394
        %397 = vst.msk [vmem:[%s356] sm:$0xf] %vm199, %v395
        %v398 = vld [vmem:[%s133 + $0x4] sm:$0xf]
        %400 = vst [vmem:[#allocation1] ss:$2 sm:$0xff] %v398
        %v401 = vld.sshfl [vmem:[#allocation1] sm:$0xff pattern:$0x75316420]
        %402 = vrot.lane.b32.xlu0 %v401, 16
        %v403 = vpop.permute.xlu0 %402
        %405 = vst.msk [vmem:[%s356] sm:$0xf] %vm208, %v403
        %v406 = vld [vmem:[%s133 + $0x4] sm:$0xf]
        %408 = vst [vmem:[#allocation1] ss:$2 sm:$0xff] %v406
        %v409 = vld.sshfl [vmem:[#allocation1] sm:$0xff pattern:$0x75316420]
        %410 = vrot.lane.b32.xlu0 %v409, 8
        %v411 = vpop.permute.xlu0 %410
        %413 = vst.msk [vmem:[%s356] sm:$0xf] %vm217, %v411
        %v414 = vld [vmem:[%s133] sm:$0xf]
        %416 = vst [vmem:[#allocation1] ss:$2 sm:$0xff] %v414
        %v417 = vld.sshfl [vmem:[#allocation1] sm:$0xff pattern:$0x75316420]
        %418 = vrot.lane.b32.xlu0 %v417, 60
        %v419 = vpop.permute.xlu0 %418
        %s421 = scalar_lea.vmem %s152, 16 [#allocation5]
        %422 = vst.msk [vmem:[%s421] sm:$0xf] %vm154, %v419
        %v423 = vld [vmem:[%s133] sm:$0xf]
        %425 = vst [vmem:[#allocation1] ss:$2 sm:$0xff] %v423
        %v426 = vld.sshfl [vmem:[#allocation1] sm:$0xff pattern:$0x75316420]
        %427 = vrot.lane.b32.xlu0 %v426, 52
        %v428 = vpop.permute.xlu0 %427
        %430 = vst.msk [vmem:[%s421] sm:$0xf] %vm163, %v428
        %v431 = vld [vmem:[%s133] sm:$0xf]
        %433 = vst [vmem:[#allocation1] ss:$2 sm:$0xff] %v431
        %v434 = vld.sshfl [vmem:[#allocation1] sm:$0xff pattern:$0x75316420]
        %435 = vrot.lane.b32.xlu0 %v434, 44
        %v436 = vpop.permute.xlu0 %435
        %438 = vst.msk [vmem:[%s421] sm:$0xf] %vm172, %v436
        %v439 = vld [vmem:[%s133] sm:$0xf]
        %441 = vst [vmem:[#allocation1] ss:$2 sm:$0xff] %v439
        %v442 = vld.sshfl [vmem:[#allocation1] sm:$0xff pattern:$0x75316420]
        %443 = vrot.lane.b32.xlu0 %v442, 36
        %v444 = vpop.permute.xlu0 %443
        %446 = vst.msk [vmem:[%s421] sm:$0xf] %vm181, %v444
        %v447 = vld [vmem:[%s133 + $0x4] sm:$0xf]
        %449 = vst [vmem:[#allocation1] ss:$2 sm:$0xff] %v447
        %v450 = vld.sshfl [vmem:[#allocation1] sm:$0xff pattern:$0x75316420]
        %451 = vrot.lane.b32.xlu0 %v450, 28
        %v452 = vpop.permute.xlu0 %451
        %454 = vst.msk [vmem:[%s421] sm:$0xf] %vm190, %v452
        %v455 = vld [vmem:[%s133 + $0x4] sm:$0xf]
        %457 = vst [vmem:[#allocation1] ss:$2 sm:$0xff] %v455
        %v458 = vld.sshfl [vmem:[#allocation1] sm:$0xff pattern:$0x75316420]
        %459 = vrot.lane.b32.xlu0 %v458, 20
        %v460 = vpop.permute.xlu0 %459
        %462 = vst.msk [vmem:[%s421] sm:$0xf] %vm199, %v460
        %v463 = vld [vmem:[%s133 + $0x4] sm:$0xf]
        %465 = vst [vmem:[#allocation1] ss:$2 sm:$0xff] %v463
        %v466 = vld.sshfl [vmem:[#allocation1] sm:$0xff pattern:$0x75316420]
        %467 = vrot.lane.b32.xlu0 %v466, 12
        %v468 = vpop.permute.xlu0 %467
        %470 = vst.msk [vmem:[%s421] sm:$0xf] %vm208, %v468
        %v471 = vld [vmem:[%s133 + $0x4] sm:$0xf]
        %473 = vst [vmem:[#allocation1] ss:$2 sm:$0xff] %v471
        %v474 = vld.sshfl [vmem:[#allocation1] sm:$0xff pattern:$0x75316420]
        %475 = vrot.lane.b32.xlu0 %v474, 4
        %v476 = vpop.permute.xlu0 %475
        %478 = vst.msk [vmem:[%s421] sm:$0xf] %vm217, %v476
        %v479 = vld [vmem:[%s133] sm:$0xf]
        %481 = vst [vmem:[#allocation1] ss:$2 sm:$0xff] %v479
        %v482 = vld.sshfl [vmem:[#allocation1] sm:$0xff pattern:$0x75316420]
        %483 = vrot.lane.b32.xlu0 %v482, 56
        %v484 = vpop.permute.xlu0 %483
        %s486 = scalar_lea.vmem %s152, 20 [#allocation5]
        %487 = vst.msk [vmem:[%s486] sm:$0xf] %vm154, %v484
        %v488 = vld [vmem:[%s133] sm:$0xf]
        %490 = vst [vmem:[#allocation1] ss:$2 sm:$0xff] %v488
        %v491 = vld.sshfl [vmem:[#allocation1] sm:$0xff pattern:$0x75316420]
        %492 = vrot.lane.b32.xlu0 %v491, 48
        %v493 = vpop.permute.xlu0 %492
        %495 = vst.msk [vmem:[%s486] sm:$0xf] %vm163, %v493
        %v496 = vld [vmem:[%s133] sm:$0xf]
        %498 = vst [vmem:[#allocation1] ss:$2 sm:$0xff] %v496
        %v499 = vld.sshfl [vmem:[#allocation1] sm:$0xff pattern:$0x75316420]
        %500 = vrot.lane.b32.xlu0 %v499, 40
        %v501 = vpop.permute.xlu0 %500
        %503 = vst.msk [vmem:[%s486] sm:$0xf] %vm172, %v501
        %v504 = vld [vmem:[%s133] sm:$0xf]
        %506 = vst [vmem:[#allocation1] ss:$2 sm:$0xff] %v504
        %v507 = vld.sshfl [vmem:[#allocation1] sm:$0xff pattern:$0x75316420]
        %508 = vrot.lane.b32.xlu0 %v507, 32
        %v509 = vpop.permute.xlu0 %508
        %511 = vst.msk [vmem:[%s486] sm:$0xf] %vm181, %v509
        %v512 = vld [vmem:[%s133 + $0x4] sm:$0xf]
        %514 = vst [vmem:[#allocation1] ss:$2 sm:$0xff] %v512
        %v515 = vld.sshfl [vmem:[#allocation1] sm:$0xff pattern:$0x75316420]
        %516 = vrot.lane.b32.xlu0 %v515, 24
        %v517 = vpop.permute.xlu0 %516
        %519 = vst.msk [vmem:[%s486] sm:$0xf] %vm190, %v517
        %v520 = vld [vmem:[%s133 + $0x4] sm:$0xf]
        %522 = vst [vmem:[#allocation1] ss:$2 sm:$0xff] %v520
        %v523 = vld.sshfl [vmem:[#allocation1] sm:$0xff pattern:$0x75316420]
        %524 = vrot.lane.b32.xlu0 %v523, 16
        %v525 = vpop.permute.xlu0 %524
        %527 = vst.msk [vmem:[%s486] sm:$0xf] %vm199, %v525
        %v528 = vld [vmem:[%s133 + $0x4] sm:$0xf]
        %530 = vst [vmem:[#allocation1] ss:$2 sm:$0xff] %v528
        %v531 = vld.sshfl [vmem:[#allocation1] sm:$0xff pattern:$0x75316420]
        %532 = vrot.lane.b32.xlu0 %v531, 8
        %v533 = vpop.permute.xlu0 %532
        %535 = vst.msk [vmem:[%s486] sm:$0xf] %vm208, %v533
        %v536 = vld [vmem:[%s133 + $0x4] sm:$0xf]
        %537 = vst.msk [vmem:[%s486] sm:$0xf] %vm217, %v536
        %v538 = vld [vmem:[%s133 + $0x4] sm:$0xf]
        %s539 = scalar_lea.vmem %s152, 24 [#allocation5]
        %540 = vst.msk [vmem:[%s539] sm:$0xf] %vm154, %v538
        %v541 = vld [vmem:[%s133 + $0x4] sm:$0xf]
        %543 = vst [vmem:[#allocation1] ss:$2 sm:$0xff] %v541
        %v544 = vld.sshfl [vmem:[#allocation1] sm:$0xff pattern:$0x75316420]
        %545 = vrot.lane.b32.xlu0 %v544, 120
        %v546 = vpop.permute.xlu0 %545
        %548 = vst.msk [vmem:[%s539] sm:$0xf] %vm163, %v546
        %v549 = vld [vmem:[%s133 + $0x4] sm:$0xf]
        %551 = vst [vmem:[#allocation1] ss:$2 sm:$0xff] %v549
        %v552 = vld.sshfl [vmem:[#allocation1] sm:$0xff pattern:$0x75316420]
        %553 = vrot.lane.b32.xlu0 %v552, 112
        %v554 = vpop.permute.xlu0 %553
        %556 = vst.msk [vmem:[%s539] sm:$0xf] %vm172, %v554
        %v557 = vld [vmem:[%s133 + $0x4] sm:$0xf]
        %559 = vst [vmem:[#allocation1] ss:$2 sm:$0xff] %v557
        %v560 = vld.sshfl [vmem:[#allocation1] sm:$0xff pattern:$0x75316420]
        %561 = vrot.lane.b32.xlu0 %v560, 104
        %v562 = vpop.permute.xlu0 %561
        %564 = vst.msk [vmem:[%s539] sm:$0xf] %vm181, %v562
        %v565 = vld [vmem:[%s133 + $0x4] sm:$0xf]
        %567 = vst [vmem:[#allocation1] ss:$2 sm:$0xff] %v565
        %v568 = vld.sshfl [vmem:[#allocation1] sm:$0xff pattern:$0x75316420]
        %569 = vrot.lane.b32.xlu0 %v568, 96
        %v570 = vpop.permute.xlu0 %569
        %572 = vst.msk [vmem:[%s539] sm:$0xf] %vm190, %v570
        %v573 = vld [vmem:[%s133 + $0x4] sm:$0xf]
        %575 = vst [vmem:[#allocation1] ss:$2 sm:$0xff] %v573
        %v576 = vld.sshfl [vmem:[#allocation1] sm:$0xff pattern:$0x75316420]
        %577 = vrot.lane.b32.xlu0 %v576, 88
        %v578 = vpop.permute.xlu0 %577
        %580 = vst.msk [vmem:[%s539] sm:$0xf] %vm199, %v578
        %v581 = vld [vmem:[%s133 + $0x4] sm:$0xf]
        %583 = vst [vmem:[#allocation1] ss:$2 sm:$0xff] %v581
        %v584 = vld.sshfl [vmem:[#allocation1] sm:$0xff pattern:$0x75316420]
        %585 = vrot.lane.b32.xlu0 %v584, 80
        %v586 = vpop.permute.xlu0 %585
        %588 = vst.msk [vmem:[%s539] sm:$0xf] %vm208, %v586
        %v589 = vld [vmem:[%s133 + $0x4] sm:$0xf]
        %591 = vst [vmem:[#allocation1] ss:$2 sm:$0xff] %v589
        %v592 = vld.sshfl [vmem:[#allocation1] sm:$0xff pattern:$0x75316420]
        %593 = vrot.lane.b32.xlu0 %v592, 72
        %v594 = vpop.permute.xlu0 %593
        %596 = vst.msk [vmem:[%s539] sm:$0xf] %vm217, %v594
        %v597 = vld [vmem:[%s133 + $0x4] sm:$0xf]
        %599 = vst [vmem:[#allocation1] ss:$2 sm:$0xff] %v597
        %v600 = vld.sshfl [vmem:[#allocation1] sm:$0xff pattern:$0x75316420]
        %601 = vrot.lane.b32.xlu0 %v600, 124
        %v602 = vpop.permute.xlu0 %601
        %s604 = scalar_lea.vmem %s152, 28 [#allocation5]
        %605 = vst.msk [vmem:[%s604] sm:$0xf] %vm154, %v602
        %v606 = vld [vmem:[%s133 + $0x4] sm:$0xf]
        %608 = vst [vmem:[#allocation1] ss:$2 sm:$0xff] %v606
        %v609 = vld.sshfl [vmem:[#allocation1] sm:$0xff pattern:$0x75316420]
        %610 = vrot.lane.b32.xlu0 %v609, 116
        %v611 = vpop.permute.xlu0 %610
        %613 = vst.msk [vmem:[%s604] sm:$0xf] %vm163, %v611
        %v614 = vld [vmem:[%s133 + $0x4] sm:$0xf]
        %616 = vst [vmem:[#allocation1] ss:$2 sm:$0xff] %v614
        %v617 = vld.sshfl [vmem:[#allocation1] sm:$0xff pattern:$0x75316420]
        %618 = vrot.lane.b32.xlu0 %v617, 108
        %v619 = vpop.permute.xlu0 %618
        %621 = vst.msk [vmem:[%s604] sm:$0xf] %vm172, %v619
        %v622 = vld [vmem:[%s133 + $0x4] sm:$0xf]
        %624 = vst [vmem:[#allocation1] ss:$2 sm:$0xff] %v622
        %v625 = vld.sshfl [vmem:[#allocation1] sm:$0xff pattern:$0x75316420]
        %626 = vrot.lane.b32.xlu0 %v625, 100
        %v627 = vpop.permute.xlu0 %626
        %629 = vst.msk [vmem:[%s604] sm:$0xf] %vm181, %v627
        %v630 = vld [vmem:[%s133 + $0x4] sm:$0xf]
        %632 = vst [vmem:[#allocation1] ss:$2 sm:$0xff] %v630
        %v633 = vld.sshfl [vmem:[#allocation1] sm:$0xff pattern:$0x75316420]
        %634 = vrot.lane.b32.xlu0 %v633, 92
        %v635 = vpop.permute.xlu0 %634
        %637 = vst.msk [vmem:[%s604] sm:$0xf] %vm190, %v635
        %v638 = vld [vmem:[%s133 + $0x4] sm:$0xf]
        %640 = vst [vmem:[#allocation1] ss:$2 sm:$0xff] %v638
        %v641 = vld.sshfl [vmem:[#allocation1] sm:$0xff pattern:$0x75316420]
        %642 = vrot.lane.b32.xlu0 %v641, 84
        %v643 = vpop.permute.xlu0 %642
        %645 = vst.msk [vmem:[%s604] sm:$0xf] %vm199, %v643
        %v646 = vld [vmem:[%s133 + $0x4] sm:$0xf]
        %648 = vst [vmem:[#allocation1] ss:$2 sm:$0xff] %v646
        %v649 = vld.sshfl [vmem:[#allocation1] sm:$0xff pattern:$0x75316420]
        %650 = vrot.lane.b32.xlu0 %v649, 76
        %v651 = vpop.permute.xlu0 %650
        %653 = vst.msk [vmem:[%s604] sm:$0xf] %vm208, %v651
        %v654 = vld [vmem:[%s133 + $0x4] sm:$0xf]
        %656 = vst [vmem:[#allocation1] ss:$2 sm:$0xff] %v654
        %v657 = vld.sshfl [vmem:[#allocation1] sm:$0xff pattern:$0x75316420]
        %658 = vrot.lane.b32.xlu0 %v657, 68
        %v659 = vpop.permute.xlu0 %658
        %661 = vst.msk [vmem:[%s604] sm:$0xf] %vm217, %v659
        %v662 = vld [vmem:[%s133 + $0x4] sm:$0xf]
        %664 = vst [vmem:[#allocation1] ss:$2 sm:$0xff] %v662
        %v665 = vld.sshfl [vmem:[#allocation1] sm:$0xff pattern:$0x75316420]
        %666 = vrot.lane.b32.xlu0 %v665, 120
        %v667 = vpop.permute.xlu0 %666
        %s669 = scalar_lea.vmem %s152, 32 [#allocation5]
        %670 = vst.msk [vmem:[%s669] sm:$0xf] %vm154, %v667
        %v671 = vld [vmem:[%s133 + $0x4] sm:$0xf]
        %673 = vst [vmem:[#allocation1] ss:$2 sm:$0xff] %v671
        %v674 = vld.sshfl [vmem:[#allocation1] sm:$0xff pattern:$0x75316420]
        %675 = vrot.lane.b32.xlu0 %v674, 112
        %v676 = vpop.permute.xlu0 %675
        %678 = vst.msk [vmem:[%s669] sm:$0xf] %vm163, %v676
        %v679 = vld [vmem:[%s133 + $0x4] sm:$0xf]
        %681 = vst [vmem:[#allocation1] ss:$2 sm:$0xff] %v679
        %v682 = vld.sshfl [vmem:[#allocation1] sm:$0xff pattern:$0x75316420]
        %683 = vrot.lane.b32.xlu0 %v682, 104
        %v684 = vpop.permute.xlu0 %683
        %686 = vst.msk [vmem:[%s669] sm:$0xf] %vm172, %v684
        %v687 = vld [vmem:[%s133 + $0x4] sm:$0xf]
        %689 = vst [vmem:[#allocation1] ss:$2 sm:$0xff] %v687
        %v690 = vld.sshfl [vmem:[#allocation1] sm:$0xff pattern:$0x75316420]
        %691 = vrot.lane.b32.xlu0 %v690, 96
        %v692 = vpop.permute.xlu0 %691
        %694 = vst.msk [vmem:[%s669] sm:$0xf] %vm181, %v692
        %v695 = vld [vmem:[%s133 + $0x4] sm:$0xf]
        %697 = vst [vmem:[#allocation1] ss:$2 sm:$0xff] %v695
        %v698 = vld.sshfl [vmem:[#allocation1] sm:$0xff pattern:$0x75316420]
        %699 = vrot.lane.b32.xlu0 %v698, 88
        %v700 = vpop.permute.xlu0 %699
        %702 = vst.msk [vmem:[%s669] sm:$0xf] %vm190, %v700
        %v703 = vld [vmem:[%s133 + $0x4] sm:$0xf]
        %705 = vst [vmem:[#allocation1] ss:$2 sm:$0xff] %v703
        %v706 = vld.sshfl [vmem:[#allocation1] sm:$0xff pattern:$0x75316420]
        %707 = vrot.lane.b32.xlu0 %v706, 80
        %v708 = vpop.permute.xlu0 %707
        %710 = vst.msk [vmem:[%s669] sm:$0xf] %vm199, %v708
        %v711 = vld [vmem:[%s133 + $0x4] sm:$0xf]
        %713 = vst [vmem:[#allocation1] ss:$2 sm:$0xff] %v711
        %v714 = vld.sshfl [vmem:[#allocation1] sm:$0xff pattern:$0x75316420]
        %715 = vrot.lane.b32.xlu0 %v714, 72
        %v716 = vpop.permute.xlu0 %715
        %718 = vst.msk [vmem:[%s669] sm:$0xf] %vm208, %v716
        %v719 = vld [vmem:[%s133 + $0x4] sm:$0xf]
        %721 = vst [vmem:[#allocation1] ss:$2 sm:$0xff] %v719
        %v722 = vld.sshfl [vmem:[#allocation1] sm:$0xff pattern:$0x75316420]
        %723 = vrot.lane.b32.xlu0 %v722, 64
        %v724 = vpop.permute.xlu0 %723
        %726 = vst.msk [vmem:[%s669] sm:$0xf] %vm217, %v724
        %s727 = sand.u32 %s68, 1
        %s728 = scalar_lea.sflag [#allocation4], %s727
        %s729 = sand.u32 %s68, 1
        %s730 = smul.addr %s729, 36
        %s731 = scalar_lea.vmem [#allocation5], %s730
        // Predicated region
        $region29: #{tpu_custom_call.1} parent=23 // pred_check
          %p732 = pneg %p78
        $region30: #{tpu_custom_call.1} parent=23 // pred_check_branch
          %734 = sbr.rel (%p732) target = $region32
        $region31: #{tpu_custom_call.1} parent=23 // pred_region
          %736 = vsyncadd %s728, 0
          %s737 = smul.addr %s22, 9
          %s738 = sadd.s32 %s23, %s737
          %s739 = smul.addr %s738, 4
          %s740 = scalar_lea.hbm %s1, %s739
          %s741 = sshll.u32 %s731, 4
          %s742 = int_to_ptr.vmem [resolvable:$true] %s741
          %s743 = sshll.u32 %s740, 4
          %s744 = int_to_ptr.hbm [resolvable:$true] %s743
          %749 = dma.vmem_to_hbm [thread:$0]  %s742, 576, %s744, %s728, 64, 64, 4
        $region32: #{tpu_custom_call.1} parent=23 // pred_fallthru
          _
      $region24: #{tpu_custom_call.1} parent=5 // pred_fallthru
        _
      %p750 = scmp.le.s32.totalorder 2, %s13
      // Predicated region
      $region33: #{tpu_custom_call.1} parent=5 // pred_check
        %p751 = pneg %p750
      $region34: #{tpu_custom_call.1} parent=5 // pred_check_branch
        %753 = sbr.rel (%p751) target = $region36
      $region35: #{tpu_custom_call.1} parent=5 // pred_region
        %s754 = ssub.s32 %s13, 2
        // Predicated region
        $region37: #{tpu_custom_call.1} parent=35 // pred_check
          %p755 = pneg %p84
        $region38: #{tpu_custom_call.1} parent=35 // pred_check_branch
          %757 = sbr.rel (%p755) target = $region40
        $region39: #{tpu_custom_call.1} parent=35 // pred_region
          %s758 = sand.u32 %s69, 1
          %s759 = scalar_lea.sflag [#allocation4], %s758
          %s760 = sand.u32 %s69, 1
          %s761 = smul.addr %s760, 36
          %s762 = scalar_lea.vmem [#allocation5], %s761
          %764 = dma.done %s759, 576
        $region40: #{tpu_custom_call.1} parent=35 // pred_fallthru
          _
      $region36: #{tpu_custom_call.1} parent=5 // pred_fallthru
        _
    $region6: #{tpu_custom_call.1} parent=1 // loop_footer
      %s17 = sadd.s32 1, %s13
    $region7: #{tpu_custom_call.1} parent=1 // loop_footer_branch
      %12 = sbr.rel target = $region3
    $region8: #{tpu_custom_call.1} parent=1 // loop_exit
      _
    %765 = vsyncpa [#allocation3], 1
    %s766 = scalar_lea.sflag [#allocation3], 1
    %767 = vsyncpa %s766, 1
    %768 = vsyncpa [#allocation4], 1
    %s769 = scalar_lea.sflag [#allocation4], 1
    %770 = vsyncpa %s769, 1

</llo_original>
